<compile_context>
chip_gen: v7x
topology: tpu7x:2x2x1
jax: 0.10.0
libtpu: 0.0.40
codegen_flags: <defaults>
</compile_context>

<pallas_src>
import functools

import jax
import jax.numpy as jnp
from jax import lax
from jax.experimental import pallas as pl
from jax.experimental.pallas import tpu as pltpu

EPS = 1e-5
LSTM_HIDDEN = 64


def _full_spec(shape):
    # whole-array block (grid is (1,), block dims == array dims)
    return pl.BlockSpec(shape, lambda i: (0,) * len(shape))


def _sigmoid(t):
    # numerically stable sigmoid via tanh (single EUP op); matches torch.sigmoid
    return 0.5 * jnp.tanh(0.5 * t) + 0.5


def _im2col_rows_owb(x, K, S):
    """im2col of an NCHW input; rows ordered (oh, ow, b), columns ordered (c, kh, kw)."""
    B, C, H, W = x.shape
    OH = (H - K) // S + 1
    OW = (W - K) // S + 1
    ih = (jnp.arange(OH) * S)[:, None] + jnp.arange(K)[None, :]   # (OH, K)
    iw = (jnp.arange(OW) * S)[:, None] + jnp.arange(K)[None, :]   # (OW, K)
    p = x[:, :, ih, :]                                            # (B, C, OH, K, W)
    p = p[:, :, :, :, iw]                                         # (B, C, OH, K, OW, K)
    p = jnp.transpose(p, (2, 4, 0, 1, 3, 5))                      # (OH, OW, B, C, kh, kw)
    return p.reshape(OH * OW * B, C * K * K), OH, OW


class DQNPallas:
    def __init__(self, frame_dim, frame_channels, other_dim, output_dim, key):
        self.frame_dim = tuple(frame_dim)
        self.frame_channels = frame_channels
        self.other_dim = other_dim
        self.output_dim = output_dim

        H, W = frame_dim
        self.oh1 = (H - 8) // 4 + 1
        self.ow1 = (W - 8) // 4 + 1
        self.oh2 = (self.oh1 - 4) // 2 + 1
        self.ow2 = (self.ow1 - 4) // 2 + 1
        self.n_pos2 = self.oh2 * self.ow2
        self.conv_out = 32 * self.n_pos2
        fc1_in = self.conv_out + other_dim

        ks = jax.random.split(key, 8)
        f32, bf16 = jnp.float32, jnp.bfloat16
        s = 0.05

        # ---------------- parameters in torch layout ----------------
        w_conv1_t = jax.random.normal(ks[0], (16, frame_channels, 8, 8), f32) * s  # (OC,IC,KH,KW)
        w_conv2_t = jax.random.normal(ks[1], (32, 16, 4, 4), f32) * s
        w_fc1_t = jax.random.normal(ks[2], (256, fc1_in), f32) * s                 # (out, in)
        w_fc2_t = jax.random.normal(ks[3], (128, 256), f32) * s
        b_fc2_t = jnp.zeros((128,), f32)
        w_ih_t = jax.random.normal(ks[4], (4 * LSTM_HIDDEN, 128), f32) * s         # (4H, in)
        b_ih_t = jax.random.normal(ks[5], (4 * LSTM_HIDDEN,), f32) * s
        b_hh_t = jax.random.normal(ks[6], (4 * LSTM_HIDDEN,), f32) * s
        w_fc3_t = jax.random.normal(ks[7], (output_dim, LSTM_HIDDEN), f32) * s
        b_fc3_t = jnp.zeros((output_dim,), f32)
        # conv1/conv2/fc1 biases and lstm weight_hh are intentionally not materialised:
        #   - those biases are exactly cancelled by the following BatchNorm mean subtraction
        #   - weight_hh multiplies the zero initial hidden state for the single LSTM step

        # ------------- pack into kernel layouts (one-time, offline) -------------
        # conv1: (OC,IC,KH,KW) -> (IC*KH*KW, OC); patch columns are (c, kh, kw)
        self.w_c1 = w_conv1_t.reshape(16, -1).T.astype(bf16)
        # conv2: in-kernel patch columns are (kh, kw, ic) -> weight rows in that order
        self.w_c2 = jnp.transpose(w_conv2_t, (2, 3, 1, 0)).reshape(-1, 32).astype(bf16)
        # fc1: (out, in) -> (in, out); kernel produces conv features in (position p, channel c)
        # order, torch's x.view(B,-1) flatten is (c, p) -> permute the feature rows offline.
        w1 = w_fc1_t.T                                          # (fc1_in, 256)
        w1_other = w1[:other_dim]
        w1_feat = w1[other_dim:]                                # torch row index = c*n_pos2 + p
        j = jnp.arange(self.conv_out)                           # ours: j = p*32 + c
        perm = (j % 32) * self.n_pos2 + (j // 32)
        self.w1 = jnp.concatenate([w1_other, w1_feat[perm]], axis=0).astype(bf16)
        self.w2 = w_fc2_t.T.astype(bf16)                        # (256, 128)
        self.b2 = b_fc2_t[None, :]                              # (1, 128) f32
        self.w_ih = w_ih_t.T.astype(bf16)                       # (128, 4H)
        self.b_lstm = (b_ih_t + b_hh_t)[None, :]                # (1, 4H) f32
        self.w3 = w_fc3_t.T.astype(bf16)                        # (H, out)
        self.b3 = b_fc3_t[None, :]                              # (1, out) f32
        # BatchNorm affine params (fresh torch module: gamma=1, beta=0), kept f32
        self.g1 = jnp.ones((1, 16), f32);   self.be1 = jnp.zeros((1, 16), f32)
        self.g2 = jnp.ones((1, 32), f32);   self.be2 = jnp.zeros((1, 32), f32)
        self.g3 = jnp.ones((1, 256), f32);  self.be3 = jnp.zeros((1, 256), f32)

    @functools.partial(jax.jit, static_argnums=0)
    def __call__(self, x):
        B = x.shape[0]
        Hf, Wf = self.frame_dim
        C = self.frame_channels
        OH2, OW2, OW1, P2 = self.oh2, self.ow2, self.ow1, self.n_pos2

        x_other = x[:, :self.other_dim]
        x_frame = x[:, self.other_dim:].reshape(B, C, Hf, Wf)

        # conv1 im2col stays as a tiny XLA preprocessing fusion of the *kernel input*
        # (everything downstream of it is fused in the single Pallas kernel).
        patches1, _, _ = _im2col_rows_owb(x_frame, 8, 4)         # rows (oh,ow,b), cols (c,kh,kw)
        patches1 = patches1.astype(jnp.bfloat16)

        def kernel(p1_ref, xo_ref, wc1_ref, g1_ref, be1_ref,
                   wc2_ref, g2_ref, be2_ref, w1_ref, g3_ref, be3_ref,
                   w2_ref, b2_ref, wih_ref, bl_ref, w3_ref, b3_ref, o_ref):
            f32, bf16 = jnp.float32, jnp.bfloat16

            # ---- conv1 (patch matmul) + BN1(train, folded) + ReLU; rows (oh, ow, b)
            y1 = jnp.dot(p1_ref[...], wc1_ref[...], preferred_element_type=f32)
            m1 = jnp.mean(y1, axis=0, keepdims=True)
            v1 = jnp.mean((y1 - m1) ** 2, axis=0, keepdims=True)
            s1 = g1_ref[...] * lax.rsqrt(v1 + EPS)
            y1 = jnp.maximum(y1 * s1 + (be1_ref[...] - m1 * s1), 0.0)   # (OH1*OW1*B, 16)

            # ---- conv2: im2col built in VMEM with static row slices + lane concat
            pos_patches = []
            for oh in range(OH2):
                for ow in range(OW2):
                    cols = []
                    for kh in range(4):
                        for kw in range(4):
                            r0 = ((2 * oh + kh) * OW1 + (2 * ow + kw)) * B
                            cols.append(y1[r0:r0 + B, :])               # (B, 16)
                    pos_patches.append(jnp.concatenate(cols, axis=-1))  # (B, 256)
            p2 = jnp.concatenate(pos_patches, axis=0).astype(bf16)      # (P2*B, 256), rows (p, b)

            y2 = jnp.dot(p2, wc2_ref[...], preferred_element_type=f32)  # (P2*B, 32)
            m2 = jnp.mean(y2, axis=0, keepdims=True)
            v2 = jnp.mean((y2 - m2) ** 2, axis=0, keepdims=True)
            s2 = g2_ref[...] * lax.rsqrt(v2 + EPS)
            y2 = jnp.maximum(y2 * s2 + (be2_ref[...] - m2 * s2), 0.0)

            # ---- cat(other, conv features in (p, c) order); fc1 weight rows pre-permuted
            xin = jnp.concatenate(
                [xo_ref[...]] + [y2[pp * B:(pp + 1) * B, :] for pp in range(P2)], axis=-1)

            # ---- fc1 (bias cancelled by BN3) + BN3(train, folded) + ReLU
            h = jnp.dot(xin.astype(bf16), w1_ref[...], preferred_element_type=f32)
            m3 = jnp.mean(h, axis=0, keepdims=True)
            v3 = jnp.mean((h - m3) ** 2, axis=0, keepdims=True)
            s3 = g3_ref[...] * lax.rsqrt(v3 + EPS)
            h = jnp.maximum(h * s3 + (be3_ref[...] - m3 * s3), 0.0)     # (B, 256)

            # ---- fc2 + ReLU
            z = jnp.maximum(
                jnp.dot(h.astype(bf16), w2_ref[...], preferred_element_type=f32) + b2_ref[...],
                0.0)                                                    # (B, 128)

            # ---- LSTM single step, zero (h0, c0); forget gate is dead (c0 == 0)
            gates = (jnp.dot(z.astype(bf16), wih_ref[...], preferred_element_type=f32)
                     + bl_ref[...])                                     # (B, 4H), order i,f,g,o
            Hh = LSTM_HIDDEN
            i_g = _sigmoid(gates[:, 0:Hh])
            g_g = jnp.tanh(gates[:, 2 * Hh:3 * Hh])
            o_g = _sigmoid(gates[:, 3 * Hh:4 * Hh])
            h_t = o_g * jnp.tanh(i_g * g_g)                             # (B, 64)

            # ---- fc3
            o_ref[...] = (jnp.dot(h_t.astype(bf16), w3_ref[...], preferred_element_type=f32)
                          + b3_ref[...]).astype(o_ref.dtype)

        args = (patches1, x_other, self.w_c1, self.g1, self.be1,
                self.w_c2, self.g2, self.be2, self.w1, self.g3, self.be3,
                self.w2, self.b2, self.w_ih, self.b_lstm, self.w3, self.b3)

        return pl.pallas_call(
            kernel,
            out_shape=jax.ShapeDtypeStruct((B, self.output_dim), jnp.float32),
            grid=(1,),
            in_specs=[_full_spec(a.shape) for a in args],
            out_specs=_full_spec((B, self.output_dim)),
            compiler_params=pltpu.CompilerParams(dimension_semantics=("arbitrary",)),
        )(*args)
        # TODO(synk): the torch module also updates self.lstm_hidden as a side effect; that
        # stateful attribute has no effect on the returned value and is not modeled.


if __name__ == "__main__":
    frame_dim = (28, 28)
    frame_channels = 4
    other_dim = 16
    output_dim = 8
    batch = 4

    key = jax.random.PRNGKey(0)
    k_params, k_x = jax.random.split(key)

    model = DQNPallas(frame_dim, frame_channels, other_dim, output_dim, k_params)
    x = jax.random.normal(
        k_x, (batch, other_dim + frame_channels * frame_dim[0] * frame_dim[1]), jnp.float32)

    out = model(x)
    out = jax.block_until_ready(out)
    assert out.shape == (batch, output_dim), out.shape
    assert bool(jnp.all(jnp.isfinite(out)))
    print("KERNEL_OK")
</pallas_src>

<mosaic_0001>
module attributes {stable_mosaic.version = 11 : i64} {
  func.func @kernel(%arg0: i32, %arg1: memref<144x256xbf16, #tpu.memory_space<vmem>>, %arg2: memref<4x16xf32, #tpu.memory_space<vmem>>, %arg3: memref<256x16xbf16, #tpu.memory_space<vmem>>, %arg4: memref<1x16xf32, #tpu.memory_space<vmem>>, %arg5: memref<1x16xf32, #tpu.memory_space<vmem>>, %arg6: memref<256x32xbf16, #tpu.memory_space<vmem>>, %arg7: memref<1x32xf32, #tpu.memory_space<vmem>>, %arg8: memref<1x32xf32, #tpu.memory_space<vmem>>, %arg9: memref<144x256xbf16, #tpu.memory_space<vmem>>, %arg10: memref<1x256xf32, #tpu.memory_space<vmem>>, %arg11: memref<1x256xf32, #tpu.memory_space<vmem>>, %arg12: memref<256x128xbf16, #tpu.memory_space<vmem>>, %arg13: memref<1x128xf32, #tpu.memory_space<vmem>>, %arg14: memref<128x256xbf16, #tpu.memory_space<vmem>>, %arg15: memref<1x256xf32, #tpu.memory_space<vmem>>, %arg16: memref<64x8xbf16, #tpu.memory_space<vmem>>, %arg17: memref<1x8xf32, #tpu.memory_space<vmem>>, %arg18: memref<4x8xf32, #tpu.memory_space<vmem>>) attributes {dimension_semantics = [#tpu.dimension_semantics<arbitrary>], iteration_bounds = array<i64: 1>, scalar_prefetch = 0 : i64, scratch_operands = 0 : i64, tpu.core_type = #tpu.core_type<tc>, window_params = [{pipeline_mode = #tpu.pipeline_mode<synchronous>, transform_indices = @transform_0, window_bounds = array<i64: 144, 256>}, {pipeline_mode = #tpu.pipeline_mode<synchronous>, transform_indices = @transform_1, window_bounds = array<i64: 4, 16>}, {pipeline_mode = #tpu.pipeline_mode<synchronous>, transform_indices = @transform_2, window_bounds = array<i64: 256, 16>}, {pipeline_mode = #tpu.pipeline_mode<synchronous>, transform_indices = @transform_3, window_bounds = array<i64: 1, 16>}, {pipeline_mode = #tpu.pipeline_mode<synchronous>, transform_indices = @transform_4, window_bounds = array<i64: 1, 16>}, {pipeline_mode = #tpu.pipeline_mode<synchronous>, transform_indices = @transform_5, window_bounds = array<i64: 256, 32>}, {pipeline_mode = #tpu.pipeline_mode<synchronous>, transform_indices = @transform_6, window_bounds = array<i64: 1, 32>}, {pipeline_mode = #tpu.pipeline_mode<synchronous>, transform_indices = @transform_7, window_bounds = array<i64: 1, 32>}, {pipeline_mode = #tpu.pipeline_mode<synchronous>, transform_indices = @transform_8, window_bounds = array<i64: 144, 256>}, {pipeline_mode = #tpu.pipeline_mode<synchronous>, transform_indices = @transform_9, window_bounds = array<i64: 1, 256>}, {pipeline_mode = #tpu.pipeline_mode<synchronous>, transform_indices = @transform_10, window_bounds = array<i64: 1, 256>}, {pipeline_mode = #tpu.pipeline_mode<synchronous>, transform_indices = @transform_11, window_bounds = array<i64: 256, 128>}, {pipeline_mode = #tpu.pipeline_mode<synchronous>, transform_indices = @transform_12, window_bounds = array<i64: 1, 128>}, {pipeline_mode = #tpu.pipeline_mode<synchronous>, transform_indices = @transform_13, window_bounds = array<i64: 128, 256>}, {pipeline_mode = #tpu.pipeline_mode<synchronous>, transform_indices = @transform_14, window_bounds = array<i64: 1, 256>}, {pipeline_mode = #tpu.pipeline_mode<synchronous>, transform_indices = @transform_15, window_bounds = array<i64: 64, 8>}, {pipeline_mode = #tpu.pipeline_mode<synchronous>, transform_indices = @transform_16, window_bounds = array<i64: 1, 8>}, {pipeline_mode = #tpu.pipeline_mode<synchronous>, transform_indices = @transform_17, window_bounds = array<i64: 4, 8>}]} {
    %c0 = arith.constant 0 : index
    %c0_0 = arith.constant 0 : index
    %0 = vector.load %arg1[%c0, %c0_0] : memref<144x256xbf16, #tpu.memory_space<vmem>>, vector<144x256xbf16>
    %c0_1 = arith.constant 0 : index
    %c0_2 = arith.constant 0 : index
    %1 = vector.load %arg3[%c0_1, %c0_2] : memref<256x16xbf16, #tpu.memory_space<vmem>>, vector<256x16xbf16>
    %cst = arith.constant dense<0.000000e+00> : vector<144x16xf32>
    %2 = tpu.matmul %0, %1, %cst {dimension_numbers = #tpu.dot_dimension_numbers<[1], [0], [0], [1], [0, 0, 1, 1], [], []>} : vector<144x256xbf16>, vector<256x16xbf16>, vector<144x16xf32> -> vector<144x16xf32>
    %cst_3 = arith.constant dense<0.000000e+00> : vector<16xf32>
    %3 = vector.multi_reduction <add>, %2, %cst_3 [0] : vector<144x16xf32> to vector<16xf32>
    %4 = vector.shape_cast %3 : vector<16xf32> to vector<1x16xf32>
    %cst_4 = arith.constant 1.440000e+02 : f32
    %5 = vector.broadcast %cst_4 : f32 to vector<1x16xf32>
    %6 = arith.divf %4, %5 : vector<1x16xf32>
    %7 = vector.broadcast %6 : vector<1x16xf32> to vector<144x16xf32>
    %8 = arith.subf %2, %7 : vector<144x16xf32>
    %9 = arith.mulf %8, %8 : vector<144x16xf32>
    %cst_5 = arith.constant dense<0.000000e+00> : vector<16xf32>
    %10 = vector.multi_reduction <add>, %9, %cst_5 [0] : vector<144x16xf32> to vector<16xf32>
    %11 = vector.shape_cast %10 : vector<16xf32> to vector<1x16xf32>
    %cst_6 = arith.constant 1.440000e+02 : f32
    %12 = vector.broadcast %cst_6 : f32 to vector<1x16xf32>
    %13 = arith.divf %11, %12 : vector<1x16xf32>
    %c0_7 = arith.constant 0 : index
    %c0_8 = arith.constant 0 : index
    %14 = vector.load %arg4[%c0_7, %c0_8] : memref<1x16xf32, #tpu.memory_space<vmem>>, vector<1x16xf32>
    %cst_9 = arith.constant 9.99999974E-6 : f32
    %15 = vector.broadcast %cst_9 : f32 to vector<1x16xf32>
    %16 = arith.addf %13, %15 : vector<1x16xf32>
    %17 = math.rsqrt %16 : vector<1x16xf32>
    %18 = arith.mulf %14, %17 : vector<1x16xf32>
    %19 = vector.broadcast %18 : vector<1x16xf32> to vector<144x16xf32>
    %20 = arith.mulf %2, %19 : vector<144x16xf32>
    %c0_10 = arith.constant 0 : index
    %c0_11 = arith.constant 0 : index
    %21 = vector.load %arg5[%c0_10, %c0_11] : memref<1x16xf32, #tpu.memory_space<vmem>>, vector<1x16xf32>
    %22 = arith.mulf %6, %18 : vector<1x16xf32>
    %23 = arith.subf %21, %22 : vector<1x16xf32>
    %24 = vector.broadcast %23 : vector<1x16xf32> to vector<144x16xf32>
    %25 = arith.addf %20, %24 : vector<144x16xf32>
    %cst_12 = arith.constant 0.000000e+00 : f32
    %26 = vector.broadcast %cst_12 : f32 to vector<144x16xf32>
    %27 = arith.maximumf %25, %26 : vector<144x16xf32>
    %28 = vector.extract_strided_slice %27 {offsets = [0, 0], sizes = [4, 16], strides = [1, 1]} : vector<144x16xf32> to vector<4x16xf32>
    %29 = vector.extract_strided_slice %27 {offsets = [4, 0], sizes = [4, 16], strides = [1, 1]} : vector<144x16xf32> to vector<4x16xf32>
    %30 = vector.extract_strided_slice %27 {offsets = [8, 0], sizes = [4, 16], strides = [1, 1]} : vector<144x16xf32> to vector<4x16xf32>
    %31 = vector.extract_strided_slice %27 {offsets = [12, 0], sizes = [4, 16], strides = [1, 1]} : vector<144x16xf32> to vector<4x16xf32>
    %32 = vector.extract_strided_slice %27 {offsets = [24, 0], sizes = [4, 16], strides = [1, 1]} : vector<144x16xf32> to vector<4x16xf32>
    %33 = vector.extract_strided_slice %27 {offsets = [28, 0], sizes = [4, 16], strides = [1, 1]} : vector<144x16xf32> to vector<4x16xf32>
    %34 = vector.extract_strided_slice %27 {offsets = [32, 0], sizes = [4, 16], strides = [1, 1]} : vector<144x16xf32> to vector<4x16xf32>
    %35 = vector.extract_strided_slice %27 {offsets = [36, 0], sizes = [4, 16], strides = [1, 1]} : vector<144x16xf32> to vector<4x16xf32>
    %36 = vector.extract_strided_slice %27 {offsets = [48, 0], sizes = [4, 16], strides = [1, 1]} : vector<144x16xf32> to vector<4x16xf32>
    %37 = vector.extract_strided_slice %27 {offsets = [52, 0], sizes = [4, 16], strides = [1, 1]} : vector<144x16xf32> to vector<4x16xf32>
    %38 = vector.extract_strided_slice %27 {offsets = [56, 0], sizes = [4, 16], strides = [1, 1]} : vector<144x16xf32> to vector<4x16xf32>
    %39 = vector.extract_strided_slice %27 {offsets = [60, 0], sizes = [4, 16], strides = [1, 1]} : vector<144x16xf32> to vector<4x16xf32>
    %40 = vector.extract_strided_slice %27 {offsets = [72, 0], sizes = [4, 16], strides = [1, 1]} : vector<144x16xf32> to vector<4x16xf32>
    %41 = vector.extract_strided_slice %27 {offsets = [76, 0], sizes = [4, 16], strides = [1, 1]} : vector<144x16xf32> to vector<4x16xf32>
    %42 = vector.extract_strided_slice %27 {offsets = [80, 0], sizes = [4, 16], strides = [1, 1]} : vector<144x16xf32> to vector<4x16xf32>
    %43 = vector.extract_strided_slice %27 {offsets = [84, 0], sizes = [4, 16], strides = [1, 1]} : vector<144x16xf32> to vector<4x16xf32>
    %44 = tpu.concatenate %28, %29, %30, %31, %32, %33, %34, %35, %36, %37, %38, %39, %40, %41, %42, %43 in 1 : vector<4x16xf32>, vector<4x16xf32>, vector<4x16xf32>, vector<4x16xf32>, vector<4x16xf32>, vector<4x16xf32>, vector<4x16xf32>, vector<4x16xf32>, vector<4x16xf32>, vector<4x16xf32>, vector<4x16xf32>, vector<4x16xf32>, vector<4x16xf32>, vector<4x16xf32>, vector<4x16xf32>, vector<4x16xf32> -> vector<4x256xf32>
    %45 = vector.extract_strided_slice %27 {offsets = [8, 0], sizes = [4, 16], strides = [1, 1]} : vector<144x16xf32> to vector<4x16xf32>
    %46 = vector.extract_strided_slice %27 {offsets = [12, 0], sizes = [4, 16], strides = [1, 1]} : vector<144x16xf32> to vector<4x16xf32>
    %47 = vector.extract_strided_slice %27 {offsets = [16, 0], sizes = [4, 16], strides = [1, 1]} : vector<144x16xf32> to vector<4x16xf32>
    %48 = vector.extract_strided_slice %27 {offsets = [20, 0], sizes = [4, 16], strides = [1, 1]} : vector<144x16xf32> to vector<4x16xf32>
    %49 = vector.extract_strided_slice %27 {offsets = [32, 0], sizes = [4, 16], strides = [1, 1]} : vector<144x16xf32> to vector<4x16xf32>
    %50 = vector.extract_strided_slice %27 {offsets = [36, 0], sizes = [4, 16], strides = [1, 1]} : vector<144x16xf32> to vector<4x16xf32>
    %51 = vector.extract_strided_slice %27 {offsets = [40, 0], sizes = [4, 16], strides = [1, 1]} : vector<144x16xf32> to vector<4x16xf32>
    %52 = vector.extract_strided_slice %27 {offsets = [44, 0], sizes = [4, 16], strides = [1, 1]} : vector<144x16xf32> to vector<4x16xf32>
    %53 = vector.extract_strided_slice %27 {offsets = [56, 0], sizes = [4, 16], strides = [1, 1]} : vector<144x16xf32> to vector<4x16xf32>
    %54 = vector.extract_strided_slice %27 {offsets = [60, 0], sizes = [4, 16], strides = [1, 1]} : vector<144x16xf32> to vector<4x16xf32>
    %55 = vector.extract_strided_slice %27 {offsets = [64, 0], sizes = [4, 16], strides = [1, 1]} : vector<144x16xf32> to vector<4x16xf32>
    %56 = vector.extract_strided_slice %27 {offsets = [68, 0], sizes = [4, 16], strides = [1, 1]} : vector<144x16xf32> to vector<4x16xf32>
    %57 = vector.extract_strided_slice %27 {offsets = [80, 0], sizes = [4, 16], strides = [1, 1]} : vector<144x16xf32> to vector<4x16xf32>
    %58 = vector.extract_strided_slice %27 {offsets = [84, 0], sizes = [4, 16], strides = [1, 1]} : vector<144x16xf32> to vector<4x16xf32>
    %59 = vector.extract_strided_slice %27 {offsets = [88, 0], sizes = [4, 16], strides = [1, 1]} : vector<144x16xf32> to vector<4x16xf32>
    %60 = vector.extract_strided_slice %27 {offsets = [92, 0], sizes = [4, 16], strides = [1, 1]} : vector<144x16xf32> to vector<4x16xf32>
    %61 = tpu.concatenate %45, %46, %47, %48, %49, %50, %51, %52, %53, %54, %55, %56, %57, %58, %59, %60 in 1 : vector<4x16xf32>, vector<4x16xf32>, vector<4x16xf32>, vector<4x16xf32>, vector<4x16xf32>, vector<4x16xf32>, vector<4x16xf32>, vector<4x16xf32>, vector<4x16xf32>, vector<4x16xf32>, vector<4x16xf32>, vector<4x16xf32>, vector<4x16xf32>, vector<4x16xf32>, vector<4x16xf32>, vector<4x16xf32> -> vector<4x256xf32>
    %62 = vector.extract_strided_slice %27 {offsets = [48, 0], sizes = [4, 16], strides = [1, 1]} : vector<144x16xf32> to vector<4x16xf32>
    %63 = vector.extract_strided_slice %27 {offsets = [52, 0], sizes = [4, 16], strides = [1, 1]} : vector<144x16xf32> to vector<4x16xf32>
    %64 = vector.extract_strided_slice %27 {offsets = [56, 0], sizes = [4, 16], strides = [1, 1]} : vector<144x16xf32> to vector<4x16xf32>
    %65 = vector.extract_strided_slice %27 {offsets = [60, 0], sizes = [4, 16], strides = [1, 1]} : vector<144x16xf32> to vector<4x16xf32>
    %66 = vector.extract_strided_slice %27 {offsets = [72, 0], sizes = [4, 16], strides = [1, 1]} : vector<144x16xf32> to vector<4x16xf32>
    %67 = vector.extract_strided_slice %27 {offsets = [76, 0], sizes = [4, 16], strides = [1, 1]} : vector<144x16xf32> to vector<4x16xf32>
    %68 = vector.extract_strided_slice %27 {offsets = [80, 0], sizes = [4, 16], strides = [1, 1]} : vector<144x16xf32> to vector<4x16xf32>
    %69 = vector.extract_strided_slice %27 {offsets = [84, 0], sizes = [4, 16], strides = [1, 1]} : vector<144x16xf32> to vector<4x16xf32>
    %70 = vector.extract_strided_slice %27 {offsets = [96, 0], sizes = [4, 16], strides = [1, 1]} : vector<144x16xf32> to vector<4x16xf32>
    %71 = vector.extract_strided_slice %27 {offsets = [100, 0], sizes = [4, 16], strides = [1, 1]} : vector<144x16xf32> to vector<4x16xf32>
    %72 = vector.extract_strided_slice %27 {offsets = [104, 0], sizes = [4, 16], strides = [1, 1]} : vector<144x16xf32> to vector<4x16xf32>
    %73 = vector.extract_strided_slice %27 {offsets = [108, 0], sizes = [4, 16], strides = [1, 1]} : vector<144x16xf32> to vector<4x16xf32>
    %74 = vector.extract_strided_slice %27 {offsets = [120, 0], sizes = [4, 16], strides = [1, 1]} : vector<144x16xf32> to vector<4x16xf32>
    %75 = vector.extract_strided_slice %27 {offsets = [124, 0], sizes = [4, 16], strides = [1, 1]} : vector<144x16xf32> to vector<4x16xf32>
    %76 = vector.extract_strided_slice %27 {offsets = [128, 0], sizes = [4, 16], strides = [1, 1]} : vector<144x16xf32> to vector<4x16xf32>
    %77 = vector.extract_strided_slice %27 {offsets = [132, 0], sizes = [4, 16], strides = [1, 1]} : vector<144x16xf32> to vector<4x16xf32>
    %78 = tpu.concatenate %62, %63, %64, %65, %66, %67, %68, %69, %70, %71, %72, %73, %74, %75, %76, %77 in 1 : vector<4x16xf32>, vector<4x16xf32>, vector<4x16xf32>, vector<4x16xf32>, vector<4x16xf32>, vector<4x16xf32>, vector<4x16xf32>, vector<4x16xf32>, vector<4x16xf32>, vector<4x16xf32>, vector<4x16xf32>, vector<4x16xf32>, vector<4x16xf32>, vector<4x16xf32>, vector<4x16xf32>, vector<4x16xf32> -> vector<4x256xf32>
    %79 = vector.extract_strided_slice %27 {offsets = [56, 0], sizes = [4, 16], strides = [1, 1]} : vector<144x16xf32> to vector<4x16xf32>
    %80 = vector.extract_strided_slice %27 {offsets = [60, 0], sizes = [4, 16], strides = [1, 1]} : vector<144x16xf32> to vector<4x16xf32>
    %81 = vector.extract_strided_slice %27 {offsets = [64, 0], sizes = [4, 16], strides = [1, 1]} : vector<144x16xf32> to vector<4x16xf32>
    %82 = vector.extract_strided_slice %27 {offsets = [68, 0], sizes = [4, 16], strides = [1, 1]} : vector<144x16xf32> to vector<4x16xf32>
    %83 = vector.extract_strided_slice %27 {offsets = [80, 0], sizes = [4, 16], strides = [1, 1]} : vector<144x16xf32> to vector<4x16xf32>
    %84 = vector.extract_strided_slice %27 {offsets = [84, 0], sizes = [4, 16], strides = [1, 1]} : vector<144x16xf32> to vector<4x16xf32>
    %85 = vector.extract_strided_slice %27 {offsets = [88, 0], sizes = [4, 16], strides = [1, 1]} : vector<144x16xf32> to vector<4x16xf32>
    %86 = vector.extract_strided_slice %27 {offsets = [92, 0], sizes = [4, 16], strides = [1, 1]} : vector<144x16xf32> to vector<4x16xf32>
    %87 = vector.extract_strided_slice %27 {offsets = [104, 0], sizes = [4, 16], strides = [1, 1]} : vector<144x16xf32> to vector<4x16xf32>
    %88 = vector.extract_strided_slice %27 {offsets = [108, 0], sizes = [4, 16], strides = [1, 1]} : vector<144x16xf32> to vector<4x16xf32>
    %89 = vector.extract_strided_slice %27 {offsets = [112, 0], sizes = [4, 16], strides = [1, 1]} : vector<144x16xf32> to vector<4x16xf32>
    %90 = vector.extract_strided_slice %27 {offsets = [116, 0], sizes = [4, 16], strides = [1, 1]} : vector<144x16xf32> to vector<4x16xf32>
    %91 = vector.extract_strided_slice %27 {offsets = [128, 0], sizes = [4, 16], strides = [1, 1]} : vector<144x16xf32> to vector<4x16xf32>
    %92 = vector.extract_strided_slice %27 {offsets = [132, 0], sizes = [4, 16], strides = [1, 1]} : vector<144x16xf32> to vector<4x16xf32>
    %93 = vector.extract_strided_slice %27 {offsets = [136, 0], sizes = [4, 16], strides = [1, 1]} : vector<144x16xf32> to vector<4x16xf32>
    %94 = vector.extract_strided_slice %27 {offsets = [140, 0], sizes = [4, 16], strides = [1, 1]} : vector<144x16xf32> to vector<4x16xf32>
    %95 = tpu.concatenate %79, %80, %81, %82, %83, %84, %85, %86, %87, %88, %89, %90, %91, %92, %93, %94 in 1 : vector<4x16xf32>, vector<4x16xf32>, vector<4x16xf32>, vector<4x16xf32>, vector<4x16xf32>, vector<4x16xf32>, vector<4x16xf32>, vector<4x16xf32>, vector<4x16xf32>, vector<4x16xf32>, vector<4x16xf32>, vector<4x16xf32>, vector<4x16xf32>, vector<4x16xf32>, vector<4x16xf32>, vector<4x16xf32> -> vector<4x256xf32>
    %96 = tpu.concatenate %44, %61, %78, %95 in 0 : vector<4x256xf32>, vector<4x256xf32>, vector<4x256xf32>, vector<4x256xf32> -> vector<16x256xf32>
    %97 = arith.truncf %96 : vector<16x256xf32> to vector<16x256xbf16>
    %c0_13 = arith.constant 0 : index
    %c0_14 = arith.constant 0 : index
    %98 = vector.load %arg6[%c0_13, %c0_14] : memref<256x32xbf16, #tpu.memory_space<vmem>>, vector<256x32xbf16>
    %cst_15 = arith.constant dense<0.000000e+00> : vector<16x32xf32>
    %99 = tpu.matmul %97, %98, %cst_15 {dimension_numbers = #tpu.dot_dimension_numbers<[1], [0], [0], [1], [0, 0, 1, 1], [], []>} : vector<16x256xbf16>, vector<256x32xbf16>, vector<16x32xf32> -> vector<16x32xf32>
    %cst_16 = arith.constant dense<0.000000e+00> : vector<32xf32>
    %100 = vector.multi_reduction <add>, %99, %cst_16 [0] : vector<16x32xf32> to vector<32xf32>
    %101 = vector.shape_cast %100 : vector<32xf32> to vector<1x32xf32>
    %cst_17 = arith.constant 1.600000e+01 : f32
    %102 = vector.broadcast %cst_17 : f32 to vector<1x32xf32>
    %103 = arith.divf %101, %102 : vector<1x32xf32>
    %104 = vector.broadcast %103 : vector<1x32xf32> to vector<16x32xf32>
    %105 = arith.subf %99, %104 : vector<16x32xf32>
    %106 = arith.mulf %105, %105 : vector<16x32xf32>
    %cst_18 = arith.constant dense<0.000000e+00> : vector<32xf32>
    %107 = vector.multi_reduction <add>, %106, %cst_18 [0] : vector<16x32xf32> to vector<32xf32>
    %108 = vector.shape_cast %107 : vector<32xf32> to vector<1x32xf32>
    %cst_19 = arith.constant 1.600000e+01 : f32
    %109 = vector.broadcast %cst_19 : f32 to vector<1x32xf32>
    %110 = arith.divf %108, %109 : vector<1x32xf32>
    %c0_20 = arith.constant 0 : index
    %c0_21 = arith.constant 0 : index
    %111 = vector.load %arg7[%c0_20, %c0_21] : memref<1x32xf32, #tpu.memory_space<vmem>>, vector<1x32xf32>
    %cst_22 = arith.constant 9.99999974E-6 : f32
    %112 = vector.broadcast %cst_22 : f32 to vector<1x32xf32>
    %113 = arith.addf %110, %112 : vector<1x32xf32>
    %114 = math.rsqrt %113 : vector<1x32xf32>
    %115 = arith.mulf %111, %114 : vector<1x32xf32>
    %116 = vector.broadcast %115 : vector<1x32xf32> to vector<16x32xf32>
    %117 = arith.mulf %99, %116 : vector<16x32xf32>
    %c0_23 = arith.constant 0 : index
    %c0_24 = arith.constant 0 : index
    %118 = vector.load %arg8[%c0_23, %c0_24] : memref<1x32xf32, #tpu.memory_space<vmem>>, vector<1x32xf32>
    %119 = arith.mulf %103, %115 : vector<1x32xf32>
    %120 = arith.subf %118, %119 : vector<1x32xf32>
    %121 = vector.broadcast %120 : vector<1x32xf32> to vector<16x32xf32>
    %122 = arith.addf %117, %121 : vector<16x32xf32>
    %cst_25 = arith.constant 0.000000e+00 : f32
    %123 = vector.broadcast %cst_25 : f32 to vector<16x32xf32>
    %124 = arith.maximumf %122, %123 : vector<16x32xf32>
    %c0_26 = arith.constant 0 : index
    %c0_27 = arith.constant 0 : index
    %125 = vector.load %arg2[%c0_26, %c0_27] : memref<4x16xf32, #tpu.memory_space<vmem>>, vector<4x16xf32>
    %126 = vector.extract_strided_slice %124 {offsets = [0, 0], sizes = [4, 32], strides = [1, 1]} : vector<16x32xf32> to vector<4x32xf32>
    %127 = vector.extract_strided_slice %124 {offsets = [4, 0], sizes = [4, 32], strides = [1, 1]} : vector<16x32xf32> to vector<4x32xf32>
    %128 = vector.extract_strided_slice %124 {offsets = [8, 0], sizes = [4, 32], strides = [1, 1]} : vector<16x32xf32> to vector<4x32xf32>
    %129 = vector.extract_strided_slice %124 {offsets = [12, 0], sizes = [4, 32], strides = [1, 1]} : vector<16x32xf32> to vector<4x32xf32>
    %130 = tpu.concatenate %125, %126, %127, %128, %129 in 1 : vector<4x16xf32>, vector<4x32xf32>, vector<4x32xf32>, vector<4x32xf32>, vector<4x32xf32> -> vector<4x144xf32>
    %131 = arith.truncf %130 : vector<4x144xf32> to vector<4x144xbf16>
    %c0_28 = arith.constant 0 : index
    %c0_29 = arith.constant 0 : index
    %132 = vector.load %arg9[%c0_28, %c0_29] : memref<144x256xbf16, #tpu.memory_space<vmem>>, vector<144x256xbf16>
    %cst_30 = arith.constant dense<0.000000e+00> : vector<4x256xf32>
    %133 = tpu.matmul %131, %132, %cst_30 {dimension_numbers = #tpu.dot_dimension_numbers<[1], [0], [0], [1], [0, 0, 1, 1], [], []>} : vector<4x144xbf16>, vector<144x256xbf16>, vector<4x256xf32> -> vector<4x256xf32>
    %cst_31 = arith.constant dense<0.000000e+00> : vector<256xf32>
    %134 = vector.multi_reduction <add>, %133, %cst_31 [0] : vector<4x256xf32> to vector<256xf32>
    %135 = vector.shape_cast %134 : vector<256xf32> to vector<1x256xf32>
    %cst_32 = arith.constant 4.000000e+00 : f32
    %136 = vector.broadcast %cst_32 : f32 to vector<1x256xf32>
    %137 = arith.divf %135, %136 : vector<1x256xf32>
    %138 = vector.broadcast %137 : vector<1x256xf32> to vector<4x256xf32>
    %139 = arith.subf %133, %138 : vector<4x256xf32>
    %140 = arith.mulf %139, %139 : vector<4x256xf32>
    %cst_33 = arith.constant dense<0.000000e+00> : vector<256xf32>
    %141 = vector.multi_reduction <add>, %140, %cst_33 [0] : vector<4x256xf32> to vector<256xf32>
    %142 = vector.shape_cast %141 : vector<256xf32> to vector<1x256xf32>
    %cst_34 = arith.constant 4.000000e+00 : f32
    %143 = vector.broadcast %cst_34 : f32 to vector<1x256xf32>
    %144 = arith.divf %142, %143 : vector<1x256xf32>
    %c0_35 = arith.constant 0 : index
    %c0_36 = arith.constant 0 : index
    %145 = vector.load %arg10[%c0_35, %c0_36] : memref<1x256xf32, #tpu.memory_space<vmem>>, vector<1x256xf32>
    %cst_37 = arith.constant 9.99999974E-6 : f32
    %146 = vector.broadcast %cst_37 : f32 to vector<1x256xf32>
    %147 = arith.addf %144, %146 : vector<1x256xf32>
    %148 = math.rsqrt %147 : vector<1x256xf32>
    %149 = arith.mulf %145, %148 : vector<1x256xf32>
    %150 = vector.broadcast %149 : vector<1x256xf32> to vector<4x256xf32>
    %151 = arith.mulf %133, %150 : vector<4x256xf32>
    %c0_38 = arith.constant 0 : index
    %c0_39 = arith.constant 0 : index
    %152 = vector.load %arg11[%c0_38, %c0_39] : memref<1x256xf32, #tpu.memory_space<vmem>>, vector<1x256xf32>
    %153 = arith.mulf %137, %149 : vector<1x256xf32>
    %154 = arith.subf %152, %153 : vector<1x256xf32>
    %155 = vector.broadcast %154 : vector<1x256xf32> to vector<4x256xf32>
    %156 = arith.addf %151, %155 : vector<4x256xf32>
    %cst_40 = arith.constant 0.000000e+00 : f32
    %157 = vector.broadcast %cst_40 : f32 to vector<4x256xf32>
    %158 = arith.maximumf %156, %157 : vector<4x256xf32>
    %159 = arith.truncf %158 : vector<4x256xf32> to vector<4x256xbf16>
    %c0_41 = arith.constant 0 : index
    %c0_42 = arith.constant 0 : index
    %160 = vector.load %arg12[%c0_41, %c0_42] : memref<256x128xbf16, #tpu.memory_space<vmem>>, vector<256x128xbf16>
    %cst_43 = arith.constant dense<0.000000e+00> : vector<4x128xf32>
    %161 = tpu.matmul %159, %160, %cst_43 {dimension_numbers = #tpu.dot_dimension_numbers<[1], [0], [0], [1], [0, 0, 1, 1], [], []>} : vector<4x256xbf16>, vector<256x128xbf16>, vector<4x128xf32> -> vector<4x128xf32>
    %c0_44 = arith.constant 0 : index
    %c0_45 = arith.constant 0 : index
    %162 = vector.load %arg13[%c0_44, %c0_45] : memref<1x128xf32, #tpu.memory_space<vmem>>, vector<1x128xf32>
    %163 = vector.broadcast %162 : vector<1x128xf32> to vector<4x128xf32>
    %164 = arith.addf %161, %163 : vector<4x128xf32>
    %cst_46 = arith.constant 0.000000e+00 : f32
    %165 = vector.broadcast %cst_46 : f32 to vector<4x128xf32>
    %166 = arith.maximumf %164, %165 : vector<4x128xf32>
    %167 = arith.truncf %166 : vector<4x128xf32> to vector<4x128xbf16>
    %c0_47 = arith.constant 0 : index
    %c0_48 = arith.constant 0 : index
    %168 = vector.load %arg14[%c0_47, %c0_48] : memref<128x256xbf16, #tpu.memory_space<vmem>>, vector<128x256xbf16>
    %cst_49 = arith.constant dense<0.000000e+00> : vector<4x256xf32>
    %169 = tpu.matmul %167, %168, %cst_49 {dimension_numbers = #tpu.dot_dimension_numbers<[1], [0], [0], [1], [0, 0, 1, 1], [], []>} : vector<4x128xbf16>, vector<128x256xbf16>, vector<4x256xf32> -> vector<4x256xf32>
    %c0_50 = arith.constant 0 : index
    %c0_51 = arith.constant 0 : index
    %170 = vector.load %arg15[%c0_50, %c0_51] : memref<1x256xf32, #tpu.memory_space<vmem>>, vector<1x256xf32>
    %171 = vector.broadcast %170 : vector<1x256xf32> to vector<4x256xf32>
    %172 = arith.addf %169, %171 : vector<4x256xf32>
    %173 = vector.extract_strided_slice %172 {offsets = [0, 0], sizes = [4, 64], strides = [1, 1]} : vector<4x256xf32> to vector<4x64xf32>
    %cst_52 = arith.constant 5.000000e-01 : f32
    %174 = vector.broadcast %cst_52 : f32 to vector<4x64xf32>
    %175 = arith.mulf %174, %173 : vector<4x64xf32>
    %176 = math.tanh %175 : vector<4x64xf32>
    %cst_53 = arith.constant 5.000000e-01 : f32
    %177 = vector.broadcast %cst_53 : f32 to vector<4x64xf32>
    %178 = arith.mulf %177, %176 : vector<4x64xf32>
    %cst_54 = arith.constant 5.000000e-01 : f32
    %179 = vector.broadcast %cst_54 : f32 to vector<4x64xf32>
    %180 = arith.addf %178, %179 : vector<4x64xf32>
    %181 = vector.extract_strided_slice %172 {offsets = [0, 128], sizes = [4, 64], strides = [1, 1]} : vector<4x256xf32> to vector<4x64xf32>
    %182 = math.tanh %181 : vector<4x64xf32>
    %183 = vector.extract_strided_slice %172 {offsets = [0, 192], sizes = [4, 64], strides = [1, 1]} : vector<4x256xf32> to vector<4x64xf32>
    %cst_55 = arith.constant 5.000000e-01 : f32
    %184 = vector.broadcast %cst_55 : f32 to vector<4x64xf32>
    %185 = arith.mulf %184, %183 : vector<4x64xf32>
    %186 = math.tanh %185 : vector<4x64xf32>
    %cst_56 = arith.constant 5.000000e-01 : f32
    %187 = vector.broadcast %cst_56 : f32 to vector<4x64xf32>
    %188 = arith.mulf %187, %186 : vector<4x64xf32>
    %cst_57 = arith.constant 5.000000e-01 : f32
    %189 = vector.broadcast %cst_57 : f32 to vector<4x64xf32>
    %190 = arith.addf %188, %189 : vector<4x64xf32>
    %191 = arith.mulf %180, %182 : vector<4x64xf32>
    %192 = math.tanh %191 : vector<4x64xf32>
    %193 = arith.mulf %190, %192 : vector<4x64xf32>
    %194 = arith.truncf %193 : vector<4x64xf32> to vector<4x64xbf16>
    %c0_58 = arith.constant 0 : index
    %c0_59 = arith.constant 0 : index
    %195 = vector.load %arg16[%c0_58, %c0_59] : memref<64x8xbf16, #tpu.memory_space<vmem>>, vector<64x8xbf16>
    %cst_60 = arith.constant dense<0.000000e+00> : vector<4x8xf32>
    %196 = tpu.matmul %194, %195, %cst_60 {dimension_numbers = #tpu.dot_dimension_numbers<[1], [0], [0], [1], [0, 0, 1, 1], [], []>} : vector<4x64xbf16>, vector<64x8xbf16>, vector<4x8xf32> -> vector<4x8xf32>
    %c0_61 = arith.constant 0 : index
    %c0_62 = arith.constant 0 : index
    %197 = vector.load %arg17[%c0_61, %c0_62] : memref<1x8xf32, #tpu.memory_space<vmem>>, vector<1x8xf32>
    %198 = vector.broadcast %197 : vector<1x8xf32> to vector<4x8xf32>
    %199 = arith.addf %196, %198 : vector<4x8xf32>
    %c0_63 = arith.constant 0 : index
    %c0_64 = arith.constant 0 : index
    %200 = vector.load %arg18[%c0_63, %c0_64] : memref<4x8xf32, #tpu.memory_space<vmem>>, vector<4x8xf32>
    tpu.vector_store %arg18[%c0_63, %c0_64], %199 {strides = array<i32>} : memref<4x8xf32, #tpu.memory_space<vmem>>, vector<4x8xf32>,
    return
  }
  func.func @transform_0(%arg0: i32) -> (i32, i32) {
    %c0_i32 = arith.constant 0 : i32
    %c0_i32_0 = arith.constant 0 : i32
    %c0_i32_1 = arith.constant 0 : i32
    return %c0_i32, %c0_i32_0 : i32, i32
  }
  func.func @transform_1(%arg0: i32) -> (i32, i32) {
    %c0_i32 = arith.constant 0 : i32
    %c0_i32_0 = arith.constant 0 : i32
    %c0_i32_1 = arith.constant 0 : i32
    return %c0_i32, %c0_i32_0 : i32, i32
  }
  func.func @transform_2(%arg0: i32) -> (i32, i32) {
    %c0_i32 = arith.constant 0 : i32
    %c0_i32_0 = arith.constant 0 : i32
    %c0_i32_1 = arith.constant 0 : i32
    return %c0_i32, %c0_i32_0 : i32, i32
  }
  func.func @transform_3(%arg0: i32) -> (i32, i32) {
    %c0_i32 = arith.constant 0 : i32
    %c0_i32_0 = arith.constant 0 : i32
    %c0_i32_1 = arith.constant 0 : i32
    return %c0_i32, %c0_i32_0 : i32, i32
  }
  func.func @transform_4(%arg0: i32) -> (i32, i32) {
    %c0_i32 = arith.constant 0 : i32
    %c0_i32_0 = arith.constant 0 : i32
    %c0_i32_1 = arith.constant 0 : i32
    return %c0_i32, %c0_i32_0 : i32, i32
  }
  func.func @transform_5(%arg0: i32) -> (i32, i32) {
    %c0_i32 = arith.constant 0 : i32
    %c0_i32_0 = arith.constant 0 : i32
    %c0_i32_1 = arith.constant 0 : i32
    return %c0_i32, %c0_i32_0 : i32, i32
  }
  func.func @transform_6(%arg0: i32) -> (i32, i32) {
    %c0_i32 = arith.constant 0 : i32
    %c0_i32_0 = arith.constant 0 : i32
    %c0_i32_1 = arith.constant 0 : i32
    return %c0_i32, %c0_i32_0 : i32, i32
  }
  func.func @transform_7(%arg0: i32) -> (i32, i32) {
    %c0_i32 = arith.constant 0 : i32
    %c0_i32_0 = arith.constant 0 : i32
    %c0_i32_1 = arith.constant 0 : i32
    return %c0_i32, %c0_i32_0 : i32, i32
  }
  func.func @transform_8(%arg0: i32) -> (i32, i32) {
    %c0_i32 = arith.constant 0 : i32
    %c0_i32_0 = arith.constant 0 : i32
    %c0_i32_1 = arith.constant 0 : i32
    return %c0_i32, %c0_i32_0 : i32, i32
  }
  func.func @transform_9(%arg0: i32) -> (i32, i32) {
    %c0_i32 = arith.constant 0 : i32
    %c0_i32_0 = arith.constant 0 : i32
    %c0_i32_1 = arith.constant 0 : i32
    return %c0_i32, %c0_i32_0 : i32, i32
  }
  func.func @transform_10(%arg0: i32) -> (i32, i32) {
    %c0_i32 = arith.constant 0 : i32
    %c0_i32_0 = arith.constant 0 : i32
    %c0_i32_1 = arith.constant 0 : i32
    return %c0_i32, %c0_i32_0 : i32, i32
  }
  func.func @transform_11(%arg0: i32) -> (i32, i32) {
    %c0_i32 = arith.constant 0 : i32
    %c0_i32_0 = arith.constant 0 : i32
    %c0_i32_1 = arith.constant 0 : i32
    return %c0_i32, %c0_i32_0 : i32, i32
  }
  func.func @transform_12(%arg0: i32) -> (i32, i32) {
    %c0_i32 = arith.constant 0 : i32
    %c0_i32_0 = arith.constant 0 : i32
    %c0_i32_1 = arith.constant 0 : i32
    return %c0_i32, %c0_i32_0 : i32, i32
  }
  func.func @transform_13(%arg0: i32) -> (i32, i32) {
    %c0_i32 = arith.constant 0 : i32
    %c0_i32_0 = arith.constant 0 : i32
    %c0_i32_1 = arith.constant 0 : i32
    return %c0_i32, %c0_i32_0 : i32, i32
  }
  func.func @transform_14(%arg0: i32) -> (i32, i32) {
    %c0_i32 = arith.constant 0 : i32
    %c0_i32_0 = arith.constant 0 : i32
    %c0_i32_1 = arith.constant 0 : i32
    return %c0_i32, %c0_i32_0 : i32, i32
  }
  func.func @transform_15(%arg0: i32) -> (i32, i32) {
    %c0_i32 = arith.constant 0 : i32
    %c0_i32_0 = arith.constant 0 : i32
    %c0_i32_1 = arith.constant 0 : i32
    return %c0_i32, %c0_i32_0 : i32, i32
  }
  func.func @transform_16(%arg0: i32) -> (i32, i32) {
    %c0_i32 = arith.constant 0 : i32
    %c0_i32_0 = arith.constant 0 : i32
    %c0_i32_1 = arith.constant 0 : i32
    return %c0_i32, %c0_i32_0 : i32, i32
  }
  func.func @transform_17(%arg0: i32) -> (i32, i32) {
    %c0_i32 = arith.constant 0 : i32
    %c0_i32_0 = arith.constant 0 : i32
    %c0_i32_1 = arith.constant 0 : i32
    return %c0_i32, %c0_i32_0 : i32, i32
  }
}

</mosaic_0001>

<llo_original>
// kernel: a_call__.1
$region0: #{a_call__.1}
  #allocation0 [shape = 'u32[]', space=smem, size = 0x4, offset = 0x4, fixed_abs, tag = 'smem constant byte address 0x4 - core index']
  #allocation1 [shape = 'u32[144,128]{1,0:T(1,128)}', space=vmem, size = 0x12000, scoped, tag = 'internal scratch']
  %s0 = inlined_call_operand.vmem [shape: bf16[144,256], index: 0, kind: input, shape index: {}]
  %s1 = inlined_call_operand.vmem [shape: f32[4,16], index: 1, kind: input, shape index: {}]
  %s2 = inlined_call_operand.vmem [shape: bf16[256,16], index: 2, kind: input, shape index: {}]
  %s3 = inlined_call_operand.vmem [shape: f32[1,16], index: 3, kind: input, shape index: {}]
  %s4 = inlined_call_operand.vmem [shape: f32[1,16], index: 4, kind: input, shape index: {}]
  %s5 = inlined_call_operand.vmem [shape: bf16[256,32], index: 5, kind: input, shape index: {}]
  %s6 = inlined_call_operand.vmem [shape: f32[1,32], index: 6, kind: input, shape index: {}]
  %s7 = inlined_call_operand.vmem [shape: f32[1,32], index: 7, kind: input, shape index: {}]
  %s8 = inlined_call_operand.vmem [shape: bf16[144,256], index: 8, kind: input, shape index: {}]
  %s9 = inlined_call_operand.vmem [shape: f32[1,256], index: 9, kind: input, shape index: {}]
  %s10 = inlined_call_operand.vmem [shape: f32[1,256], index: 10, kind: input, shape index: {}]
  %s11 = inlined_call_operand.vmem [shape: bf16[256,128], index: 11, kind: input, shape index: {}]
  %s12 = inlined_call_operand.vmem [shape: f32[1,128], index: 12, kind: input, shape index: {}]
  %s13 = inlined_call_operand.vmem [shape: bf16[128,256], index: 13, kind: input, shape index: {}]
  %s14 = inlined_call_operand.vmem [shape: f32[1,256], index: 14, kind: input, shape index: {}]
  %s15 = inlined_call_operand.vmem [shape: bf16[64,8], index: 15, kind: input, shape index: {}]
  %s16 = inlined_call_operand.vmem [shape: f32[1,8], index: 16, kind: input, shape index: {}]
  %s17 = inlined_call_operand.hbm [shape: f32[4,8], index: 17, kind: output, shape index: {}]
  %s18 = sld [smem:[#allocation0]]
  $region78: #{a_call__.1} parent=0
    _
  %s20 = ssub.s32 1, %s18
  %s21 = scalar_select 0, %s20, %s18
  $region1: #{a_call__.1} parent=0
    #allocation2 [shape = 'u8[2048]{0}', space=vmem, size = 0x800, scoped, tag = 'output window, operand 0, single buffered']
    #allocation3 [shape = 's32[1]{0}', space=sflag, size = 0x4, scoped, tag = 'scoped memory for a_call__.1']
    %22 = vsyncpa [#allocation3], 0
    // Predicated region
    $region2: #{a_call__.1} parent=1 // pred_check
      _
    $region3: #{a_call__.1} parent=1 // pred_check_branch
      %24 = sbr.rel (0) target = $region5
    $region4: #{a_call__.1} parent=1 // pred_region
      _
    $region5: #{a_call__.1} parent=1 // pred_fallthru
      _
    // Predicated region
    $region6: #{a_call__.1} parent=1 // pred_check
      _
    $region7: #{a_call__.1} parent=1 // pred_check_branch
      %26 = sbr.rel (0) target = $region9
    $region8: #{a_call__.1} parent=1 // pred_region
      _
    $region9: #{a_call__.1} parent=1 // pred_fallthru
      _
    // Predicated region
    $region10: #{a_call__.1} parent=1 // pred_check
      _
    $region11: #{a_call__.1} parent=1 // pred_check_branch
      %28 = sbr.rel (0) target = $region13
    $region12: #{a_call__.1} parent=1 // pred_region
      _
    $region13: #{a_call__.1} parent=1 // pred_fallthru
      _
    // Predicated region
    $region14: #{a_call__.1} parent=1 // pred_check
      _
    $region15: #{a_call__.1} parent=1 // pred_check_branch
      %30 = sbr.rel (0) target = $region17
    $region16: #{a_call__.1} parent=1 // pred_region
      _
    $region17: #{a_call__.1} parent=1 // pred_fallthru
      _
    // Predicated region
    $region18: #{a_call__.1} parent=1 // pred_check
      _
    $region19: #{a_call__.1} parent=1 // pred_check_branch
      %32 = sbr.rel (0) target = $region21
    $region20: #{a_call__.1} parent=1 // pred_region
      _
    $region21: #{a_call__.1} parent=1 // pred_fallthru
      _
    // Predicated region
    $region22: #{a_call__.1} parent=1 // pred_check
      _
    $region23: #{a_call__.1} parent=1 // pred_check_branch
      %34 = sbr.rel (0) target = $region25
    $region24: #{a_call__.1} parent=1 // pred_region
      _
    $region25: #{a_call__.1} parent=1 // pred_fallthru
      _
    // Predicated region
    $region26: #{a_call__.1} parent=1 // pred_check
      _
    $region27: #{a_call__.1} parent=1 // pred_check_branch
      %36 = sbr.rel (0) target = $region29
    $region28: #{a_call__.1} parent=1 // pred_region
      _
    $region29: #{a_call__.1} parent=1 // pred_fallthru
      _
    // Predicated region
    $region30: #{a_call__.1} parent=1 // pred_check
      _
    $region31: #{a_call__.1} parent=1 // pred_check_branch
      %38 = sbr.rel (0) target = $region33
    $region32: #{a_call__.1} parent=1 // pred_region
      _
    $region33: #{a_call__.1} parent=1 // pred_fallthru
      _
    // Predicated region
    $region34: #{a_call__.1} parent=1 // pred_check
      _
    $region35: #{a_call__.1} parent=1 // pred_check_branch
      %40 = sbr.rel (0) target = $region37
    $region36: #{a_call__.1} parent=1 // pred_region
      _
    $region37: #{a_call__.1} parent=1 // pred_fallthru
      _
    // Predicated region
    $region38: #{a_call__.1} parent=1 // pred_check
      _
    $region39: #{a_call__.1} parent=1 // pred_check_branch
      %42 = sbr.rel (0) target = $region41
    $region40: #{a_call__.1} parent=1 // pred_region
      _
    $region41: #{a_call__.1} parent=1 // pred_fallthru
      _
    // Predicated region
    $region42: #{a_call__.1} parent=1 // pred_check
      _
    $region43: #{a_call__.1} parent=1 // pred_check_branch
      %44 = sbr.rel (0) target = $region45
    $region44: #{a_call__.1} parent=1 // pred_region
      _
    $region45: #{a_call__.1} parent=1 // pred_fallthru
      _
    // Predicated region
    $region46: #{a_call__.1} parent=1 // pred_check
      _
    $region47: #{a_call__.1} parent=1 // pred_check_branch
      %46 = sbr.rel (0) target = $region49
    $region48: #{a_call__.1} parent=1 // pred_region
      _
    $region49: #{a_call__.1} parent=1 // pred_fallthru
      _
    // Predicated region
    $region50: #{a_call__.1} parent=1 // pred_check
      _
    $region51: #{a_call__.1} parent=1 // pred_check_branch
      %48 = sbr.rel (0) target = $region53
    $region52: #{a_call__.1} parent=1 // pred_region
      _
    $region53: #{a_call__.1} parent=1 // pred_fallthru
      _
    // Predicated region
    $region54: #{a_call__.1} parent=1 // pred_check
      _
    $region55: #{a_call__.1} parent=1 // pred_check_branch
      %50 = sbr.rel (0) target = $region57
    $region56: #{a_call__.1} parent=1 // pred_region
      _
    $region57: #{a_call__.1} parent=1 // pred_fallthru
      _
    // Predicated region
    $region58: #{a_call__.1} parent=1 // pred_check
      _
    $region59: #{a_call__.1} parent=1 // pred_check_branch
      %52 = sbr.rel (0) target = $region61
    $region60: #{a_call__.1} parent=1 // pred_region
      _
    $region61: #{a_call__.1} parent=1 // pred_fallthru
      _
    // Predicated region
    $region62: #{a_call__.1} parent=1 // pred_check
      _
    $region63: #{a_call__.1} parent=1 // pred_check_branch
      %54 = sbr.rel (0) target = $region65
    $region64: #{a_call__.1} parent=1 // pred_region
      _
    $region65: #{a_call__.1} parent=1 // pred_fallthru
      _
    // Predicated region
    $region66: #{a_call__.1} parent=1 // pred_check
      _
    $region67: #{a_call__.1} parent=1 // pred_check_branch
      %56 = sbr.rel (0) target = $region69
    $region68: #{a_call__.1} parent=1 // pred_region
      _
    $region69: #{a_call__.1} parent=1 // pred_fallthru
      _
    %v58 = vld [vmem:[%s0] sm:$0xff]
    %v59 = vld [vmem:[%s0 + $0x8] sm:$0xff]
    %v60 = vld [vmem:[%s0 + $0x10] sm:$0xff]
    %v61 = vld [vmem:[%s0 + $0x18] sm:$0xff]
    %v62 = vld [vmem:[%s0 + $0x20] sm:$0xff]
    %v63 = vld [vmem:[%s0 + $0x28] sm:$0xff]
    %v64 = vld [vmem:[%s0 + $0x30] sm:$0xff]
    %v65 = vld [vmem:[%s0 + $0x38] sm:$0xff]
    %v66 = vld [vmem:[%s0 + $0x40] sm:$0xff]
    %v67 = vld [vmem:[%s0 + $0x48] sm:$0xff]
    %v68 = vld [vmem:[%s0 + $0x50] sm:$0xff]
    %v69 = vld [vmem:[%s0 + $0x58] sm:$0xff]
    %v70 = vld [vmem:[%s0 + $0x60] sm:$0xff]
    %v71 = vld [vmem:[%s0 + $0x68] sm:$0xff]
    %v72 = vld [vmem:[%s0 + $0x70] sm:$0xff]
    %v73 = vld [vmem:[%s0 + $0x78] sm:$0xff]
    %v74 = vld [vmem:[%s0 + $0x80] sm:$0xff]
    %v75 = vld [vmem:[%s0 + $0x88] sm:$0xff]
    %v76 = vld [vmem:[%s2] sm:$0xf]
    %v77 = vld [vmem:[%s2 + $0x4] sm:$0xf]
    %v78 = vld [vmem:[%s2 + $0x8] sm:$0xf]
    %v79 = vld [vmem:[%s2 + $0xc] sm:$0xf]
    %v80 = vld [vmem:[%s2 + $0x10] sm:$0xf]
    %v81 = vld [vmem:[%s2 + $0x14] sm:$0xf]
    %v82 = vld [vmem:[%s2 + $0x18] sm:$0xf]
    %v83 = vld [vmem:[%s2 + $0x1c] sm:$0xf]
    %v84 = vld [vmem:[%s2 + $0x20] sm:$0xf]
    %v85 = vld [vmem:[%s2 + $0x24] sm:$0xf]
    %v86 = vld [vmem:[%s2 + $0x28] sm:$0xf]
    %v87 = vld [vmem:[%s2 + $0x2c] sm:$0xf]
    %v88 = vld [vmem:[%s2 + $0x30] sm:$0xf]
    %v89 = vld [vmem:[%s2 + $0x34] sm:$0xf]
    %v90 = vld [vmem:[%s2 + $0x38] sm:$0xf]
    %v91 = vld [vmem:[%s2 + $0x3c] sm:$0xf]
    %v92 = vld [vmem:[%s2 + $0x40] sm:$0xf]
    %v93 = vld [vmem:[%s2 + $0x44] sm:$0xf]
    %v94 = vld [vmem:[%s2 + $0x48] sm:$0xf]
    %v95 = vld [vmem:[%s2 + $0x4c] sm:$0xf]
    %v96 = vld [vmem:[%s2 + $0x50] sm:$0xf]
    %v97 = vld [vmem:[%s2 + $0x54] sm:$0xf]
    %v98 = vld [vmem:[%s2 + $0x58] sm:$0xf]
    %v99 = vld [vmem:[%s2 + $0x5c] sm:$0xf]
    %v100 = vld [vmem:[%s2 + $0x60] sm:$0xf]
    %v101 = vld [vmem:[%s2 + $0x64] sm:$0xf]
    %v102 = vld [vmem:[%s2 + $0x68] sm:$0xf]
    %v103 = vld [vmem:[%s2 + $0x6c] sm:$0xf]
    %v104 = vld [vmem:[%s2 + $0x70] sm:$0xf]
    %v105 = vld [vmem:[%s2 + $0x74] sm:$0xf]
    %v106 = vld [vmem:[%s2 + $0x78] sm:$0xf]
    %v107 = vld [vmem:[%s2 + $0x7c] sm:$0xf]
    %v126 = vunpack.c.l.b16 %v58
    %v127 = vunpack.c.h.b16 %v58
    %v128 = vunpack.c.l.b16 %v59
    %v129 = vunpack.c.h.b16 %v59
    %v130 = vunpack.c.l.b16 %v60
    %v131 = vunpack.c.h.b16 %v60
    %v132 = vunpack.c.l.b16 %v61
    %v133 = vunpack.c.h.b16 %v61
    %v134 = vunpack.c.l.b16 %v62
    %v135 = vunpack.c.h.b16 %v62
    %v136 = vunpack.c.l.b16 %v63
    %v137 = vunpack.c.h.b16 %v63
    %v138 = vunpack.c.l.b16 %v64
    %v139 = vunpack.c.h.b16 %v64
    %v140 = vunpack.c.l.b16 %v65
    %v141 = vunpack.c.h.b16 %v65
    %v142 = vunpack.c.l.b16 %v66
    %v143 = vunpack.c.h.b16 %v66
    %v144 = vunpack.c.l.b16 %v67
    %v145 = vunpack.c.h.b16 %v67
    %v146 = vunpack.c.l.b16 %v68
    %v147 = vunpack.c.h.b16 %v68
    %v148 = vunpack.c.l.b16 %v69
    %v149 = vunpack.c.h.b16 %v69
    %v150 = vunpack.c.l.b16 %v70
    %v151 = vunpack.c.h.b16 %v70
    %v152 = vunpack.c.l.b16 %v71
    %v153 = vunpack.c.h.b16 %v71
    %v154 = vunpack.c.l.b16 %v72
    %v155 = vunpack.c.h.b16 %v72
    %v156 = vunpack.c.l.b16 %v73
    %v157 = vunpack.c.h.b16 %v73
    %v158 = vunpack.c.l.b16 %v74
    %v159 = vunpack.c.h.b16 %v74
    %v160 = vunpack.c.l.b16 %v75
    %v161 = vunpack.c.h.b16 %v75
    %v162 = vpack.c.b16 %v128, %v126
    %v163 = vpack.c.b16 %v129, %v127
    %v164 = vpack.c.b16 %v132, %v130
    %v165 = vpack.c.b16 %v133, %v131
    %v166 = vpack.c.b16 %v136, %v134
    %v167 = vpack.c.b16 %v137, %v135
    %v168 = vpack.c.b16 %v140, %v138
    %v169 = vpack.c.b16 %v141, %v139
    %v170 = vpack.c.b16 %v144, %v142
    %v171 = vpack.c.b16 %v145, %v143
    %v172 = vpack.c.b16 %v148, %v146
    %v173 = vpack.c.b16 %v149, %v147
    %v174 = vpack.c.b16 %v152, %v150
    %v175 = vpack.c.b16 %v153, %v151
    %v176 = vpack.c.b16 %v156, %v154
    %v177 = vpack.c.b16 %v157, %v155
    %v178 = vpack.c.b16 %v160, %v158
    %v179 = vpack.c.b16 %v161, %v159
    %v230 = vunpack.c.l.b16 %v76
    %v231 = vunpack.c.l.b16 %v77
    %v232 = vunpack.c.l.b16 %v78
    %v233 = vunpack.c.l.b16 %v79
    %v234 = vunpack.c.l.b16 %v80
    %v235 = vunpack.c.l.b16 %v81
    %v236 = vunpack.c.l.b16 %v82
    %v237 = vunpack.c.l.b16 %v83
    %v238 = vunpack.c.l.b16 %v84
    %v239 = vunpack.c.l.b16 %v85
    %v240 = vunpack.c.l.b16 %v86
    %v241 = vunpack.c.l.b16 %v87
    %v242 = vunpack.c.l.b16 %v88
    %v243 = vunpack.c.l.b16 %v89
    %v244 = vunpack.c.l.b16 %v90
    %v245 = vunpack.c.l.b16 %v91
    %v246 = vunpack.c.l.b16 %v92
    %v247 = vunpack.c.l.b16 %v93
    %v248 = vunpack.c.l.b16 %v94
    %v249 = vunpack.c.l.b16 %v95
    %v250 = vunpack.c.l.b16 %v96
    %v251 = vunpack.c.l.b16 %v97
    %v252 = vunpack.c.l.b16 %v98
    %v253 = vunpack.c.l.b16 %v99
    %v254 = vunpack.c.l.b16 %v100
    %v255 = vunpack.c.l.b16 %v101
    %v256 = vunpack.c.l.b16 %v102
    %v257 = vunpack.c.l.b16 %v103
    %v258 = vunpack.c.l.b16 %v104
    %v259 = vunpack.c.l.b16 %v105
    %v260 = vunpack.c.l.b16 %v106
    %v261 = vunpack.c.l.b16 %v107
    %v262 = vpack.c.b16 %v231, %v230
    %v263 = vpack.c.b16 %v233, %v232
    %v264 = vpack.c.b16 %v235, %v234
    %v265 = vpack.c.b16 %v237, %v236
    %v266 = vpack.c.b16 %v239, %v238
    %v267 = vpack.c.b16 %v241, %v240
    %v268 = vpack.c.b16 %v243, %v242
    %v269 = vpack.c.b16 %v245, %v244
    %v270 = vpack.c.b16 %v247, %v246
    %v271 = vpack.c.b16 %v249, %v248
    %v272 = vpack.c.b16 %v251, %v250
    %v273 = vpack.c.b16 %v253, %v252
    %v274 = vpack.c.b16 %v255, %v254
    %v275 = vpack.c.b16 %v257, %v256
    %v276 = vpack.c.b16 %v259, %v258
    %v277 = vpack.c.b16 %v261, %v260
    %294 = vmatprep.subr.bf16.mxu0 0
    %295 = vmatpush1.bf16.msra.mxu0 %v262
    %296 = vmatprep.subr.bf16.mxu0 0
    %297 = vmatpush1.bf16.msra.mxu0 %v263
    %298 = vmatprep.subr.bf16.mxu0 0
    %299 = vmatpush1.bf16.msra.mxu0 %v264
    %300 = vmatprep.subr.bf16.mxu0 0
    %301 = vmatpush1.bf16.msra.mxu0 %v265
    %302 = vmatprep.subr.bf16.mxu0 0
    %303 = vmatpush1.bf16.msra.mxu0 %v266
    %304 = vmatprep.subr.bf16.mxu0 0
    %305 = vmatpush1.bf16.msra.mxu0 %v267
    %306 = vmatprep.subr.bf16.mxu0 0
    %307 = vmatpush1.bf16.msra.mxu0 %v268
    %308 = vmatprep.subr.bf16.mxu0 0
    %309 = vmatpush1.bf16.msra.mxu0 %v269
    %310 = vmatprep.subr.bf16.mxu0 0
    %311 = vmatpush1.bf16.msra.mxu0 %v270
    %312 = vmatprep.subr.bf16.mxu0 0
    %313 = vmatpush1.bf16.msra.mxu0 %v271
    %314 = vmatprep.subr.bf16.mxu0 0
    %315 = vmatpush1.bf16.msra.mxu0 %v272
    %316 = vmatprep.subr.bf16.mxu0 0
    %317 = vmatpush1.bf16.msra.mxu0 %v273
    %318 = vmatprep.subr.bf16.mxu0 0
    %319 = vmatpush1.bf16.msra.mxu0 %v274
    %320 = vmatprep.subr.bf16.mxu0 0
    %321 = vmatpush1.bf16.msra.mxu0 %v275
    %322 = vmatprep.subr.bf16.mxu0 0
    %323 = vmatpush1.bf16.msra.mxu0 %v276
    %324 = vmatprep.subr.bf16.mxu0 0
    %325 = vmatpush1.bf16.msra.mxu0 %v277
    %326 = vmatprep.mubr.bf16.mxu0 %v163
    %327 = vmatmul.mubr.bf16.gmra.mrb[0].mxu0 %v162
    %v328 = vpop.f32.mrb[0].mxu0
    %v329 = vadd.f32 0.0, %v328
    %v330 = vpop.f32.mrb[0].mxu0
    %v331 = vpop.f32.mrb[0].mxu0
    %v332 = vadd.f32 0.0, %v331
    %v333 = vpop.f32.mrb[0].mxu0
    %334 = vmatprep.mubr.bf16.mxu0 %v165
    %335 = vmatmul.mubr.bf16.gmra.mrb[0].mxu0 %v164
    %v336 = vpop.f32.mrb[0].mxu0
    %v337 = vadd.f32 0.0, %v336
    %v338 = vpop.f32.mrb[0].mxu0
    %v339 = vpop.f32.mrb[0].mxu0
    %v340 = vadd.f32 0.0, %v339
    %v341 = vpop.f32.mrb[0].mxu0
    %342 = vmatprep.mubr.bf16.mxu0 %v167
    %343 = vmatmul.mubr.bf16.gmra.mrb[0].mxu0 %v166
    %v344 = vpop.f32.mrb[0].mxu0
    %v345 = vadd.f32 0.0, %v344
    %v346 = vpop.f32.mrb[0].mxu0
    %v347 = vpop.f32.mrb[0].mxu0
    %v348 = vadd.f32 0.0, %v347
    %v349 = vpop.f32.mrb[0].mxu0
    %350 = vmatprep.mubr.bf16.mxu0 %v169
    %351 = vmatmul.mubr.bf16.gmra.mrb[0].mxu0 %v168
    %v352 = vpop.f32.mrb[0].mxu0
    %v353 = vadd.f32 0.0, %v352
    %v354 = vpop.f32.mrb[0].mxu0
    %v355 = vpop.f32.mrb[0].mxu0
    %v356 = vadd.f32 0.0, %v355
    %v357 = vpop.f32.mrb[0].mxu0
    %358 = vmatprep.mubr.bf16.mxu0 %v171
    %359 = vmatmul.mubr.bf16.gmra.mrb[0].mxu0 %v170
    %v360 = vpop.f32.mrb[0].mxu0
    %v361 = vadd.f32 0.0, %v360
    %v362 = vpop.f32.mrb[0].mxu0
    %v363 = vpop.f32.mrb[0].mxu0
    %v364 = vadd.f32 0.0, %v363
    %v365 = vpop.f32.mrb[0].mxu0
    %366 = vmatprep.mubr.bf16.mxu0 %v173
    %367 = vmatmul.mubr.bf16.gmra.mrb[0].mxu0 %v172
    %v368 = vpop.f32.mrb[0].mxu0
    %v369 = vadd.f32 0.0, %v368
    %v370 = vpop.f32.mrb[0].mxu0
    %v371 = vpop.f32.mrb[0].mxu0
    %v372 = vadd.f32 0.0, %v371
    %v373 = vpop.f32.mrb[0].mxu0
    %374 = vmatprep.mubr.bf16.mxu0 %v175
    %375 = vmatmul.mubr.bf16.gmra.mrb[0].mxu0 %v174
    %v376 = vpop.f32.mrb[0].mxu0
    %v377 = vadd.f32 0.0, %v376
    %v378 = vpop.f32.mrb[0].mxu0
    %v379 = vpop.f32.mrb[0].mxu0
    %v380 = vadd.f32 0.0, %v379
    %v381 = vpop.f32.mrb[0].mxu0
    %382 = vmatprep.mubr.bf16.mxu0 %v177
    %383 = vmatmul.mubr.bf16.gmra.mrb[0].mxu0 %v176
    %v384 = vpop.f32.mrb[0].mxu0
    %v385 = vadd.f32 0.0, %v384
    %v386 = vpop.f32.mrb[0].mxu0
    %v387 = vpop.f32.mrb[0].mxu0
    %v388 = vadd.f32 0.0, %v387
    %v389 = vpop.f32.mrb[0].mxu0
    %390 = vmatprep.mubr.bf16.mxu0 %v179
    %391 = vmatmul.mubr.bf16.gmra.mrb[0].mxu0 %v178
    %v392 = vpop.f32.mrb[0].mxu0
    %v393 = vadd.f32 0.0, %v392
    %v394 = vpop.f32.mrb[0].mxu0
    %v395 = vpop.f32.mrb[0].mxu0
    %v396 = vadd.f32 0.0, %v395
    %v397 = vpop.f32.mrb[0].mxu0
    %398 = vdwg.mxu0
    %vm399 = vcmask 130048
    %v400 = vsel %vm399, %v329, 0.0
    %v401 = vsel %vm399, %v332, 0.0
    %v402 = vadd.f32 %v400, %v401
    %v403 = vsel %vm399, %v337, 0.0
    %v404 = vadd.f32 %v402, %v403
    %v405 = vsel %vm399, %v340, 0.0
    %v406 = vadd.f32 %v404, %v405
    %v407 = vsel %vm399, %v345, 0.0
    %v408 = vadd.f32 %v406, %v407
    %v409 = vsel %vm399, %v348, 0.0
    %v410 = vadd.f32 %v408, %v409
    %v411 = vsel %vm399, %v353, 0.0
    %v412 = vadd.f32 %v410, %v411
    %v413 = vsel %vm399, %v356, 0.0
    %v414 = vadd.f32 %v412, %v413
    %v415 = vsel %vm399, %v361, 0.0
    %v416 = vadd.f32 %v414, %v415
    %v417 = vsel %vm399, %v364, 0.0
    %v418 = vadd.f32 %v416, %v417
    %v419 = vsel %vm399, %v369, 0.0
    %v420 = vadd.f32 %v418, %v419
    %v421 = vsel %vm399, %v372, 0.0
    %v422 = vadd.f32 %v420, %v421
    %v423 = vsel %vm399, %v377, 0.0
    %v424 = vadd.f32 %v422, %v423
    %v425 = vsel %vm399, %v380, 0.0
    %v426 = vadd.f32 %v424, %v425
    %v427 = vsel %vm399, %v385, 0.0
    %v428 = vadd.f32 %v426, %v427
    %v429 = vsel %vm399, %v388, 0.0
    %v430 = vadd.f32 %v428, %v429
    %v431 = vsel %vm399, %v393, 0.0
    %v432 = vadd.f32 %v430, %v431
    %v433 = vsel %vm399, %v396, 0.0
    %v434 = vadd.f32 %v432, %v433
    %v435 = vrot.slane %v434, 4
    %v436 = vadd.f32 %v434, %v435
    %v437 = vrot.slane %v436, 2
    %v438 = vadd.f32 %v436, %v437
    %v439 = vrot.slane %v438, 1
    %v440 = vadd.f32 %v438, %v439
    %v441 = vrcp.pop 144.0
    %v442 = vmul.f32 %v440, %v441
    %v443 = vsub.f32 %v329, %v442
    %v444 = vsub.f32 %v332, %v442
    %v445 = vsub.f32 %v337, %v442
    %v446 = vsub.f32 %v340, %v442
    %v447 = vsub.f32 %v345, %v442
    %v448 = vsub.f32 %v348, %v442
    %v449 = vsub.f32 %v353, %v442
    %v450 = vsub.f32 %v356, %v442
    %v451 = vsub.f32 %v361, %v442
    %v452 = vsub.f32 %v364, %v442
    %v453 = vsub.f32 %v369, %v442
    %v454 = vsub.f32 %v372, %v442
    %v455 = vsub.f32 %v377, %v442
    %v456 = vsub.f32 %v380, %v442
    %v457 = vsub.f32 %v385, %v442
    %v458 = vsub.f32 %v388, %v442
    %v459 = vsub.f32 %v393, %v442
    %v460 = vsub.f32 %v396, %v442
    %v461 = vmul.f32 %v443, %v443
    %v462 = vmul.f32 %v444, %v444
    %v463 = vmul.f32 %v445, %v445
    %v464 = vmul.f32 %v446, %v446
    %v465 = vmul.f32 %v447, %v447
    %v466 = vmul.f32 %v448, %v448
    %v467 = vmul.f32 %v449, %v449
    %v468 = vmul.f32 %v450, %v450
    %v469 = vmul.f32 %v451, %v451
    %v470 = vmul.f32 %v452, %v452
    %v471 = vmul.f32 %v453, %v453
    %v472 = vmul.f32 %v454, %v454
    %v473 = vmul.f32 %v455, %v455
    %v474 = vmul.f32 %v456, %v456
    %v475 = vmul.f32 %v457, %v457
    %v476 = vmul.f32 %v458, %v458
    %v477 = vmul.f32 %v459, %v459
    %v478 = vmul.f32 %v460, %v460
    %v479 = vsel %vm399, %v461, 0.0
    %v480 = vsel %vm399, %v462, 0.0
    %v481 = vadd.f32 %v479, %v480
    %v482 = vsel %vm399, %v463, 0.0
    %v483 = vadd.f32 %v481, %v482
    %v484 = vsel %vm399, %v464, 0.0
    %v485 = vadd.f32 %v483, %v484
    %v486 = vsel %vm399, %v465, 0.0
    %v487 = vadd.f32 %v485, %v486
    %v488 = vsel %vm399, %v466, 0.0
    %v489 = vadd.f32 %v487, %v488
    %v490 = vsel %vm399, %v467, 0.0
    %v491 = vadd.f32 %v489, %v490
    %v492 = vsel %vm399, %v468, 0.0
    %v493 = vadd.f32 %v491, %v492
    %v494 = vsel %vm399, %v469, 0.0
    %v495 = vadd.f32 %v493, %v494
    %v496 = vsel %vm399, %v470, 0.0
    %v497 = vadd.f32 %v495, %v496
    %v498 = vsel %vm399, %v471, 0.0
    %v499 = vadd.f32 %v497, %v498
    %v500 = vsel %vm399, %v472, 0.0
    %v501 = vadd.f32 %v499, %v500
    %v502 = vsel %vm399, %v473, 0.0
    %v503 = vadd.f32 %v501, %v502
    %v504 = vsel %vm399, %v474, 0.0
    %v505 = vadd.f32 %v503, %v504
    %v506 = vsel %vm399, %v475, 0.0
    %v507 = vadd.f32 %v505, %v506
    %v508 = vsel %vm399, %v476, 0.0
    %v509 = vadd.f32 %v507, %v508
    %v510 = vsel %vm399, %v477, 0.0
    %v511 = vadd.f32 %v509, %v510
    %v512 = vsel %vm399, %v478, 0.0
    %v513 = vadd.f32 %v511, %v512
    %v514 = vrot.slane %v513, 4
    %v515 = vadd.f32 %v513, %v514
    %v516 = vrot.slane %v515, 2
    %v517 = vadd.f32 %v515, %v516
    %v518 = vrot.slane %v517, 1
    %v519 = vadd.f32 %v517, %v518
    %v520 = vmul.f32 %v519, %v441
    %v521 = vld [vmem:[%s3] sm:$0x1]
    %v522 = vadd.f32 %v520, 1e-05
    %v523 = vrsqrt.pop %v522
    %v524 = vmul.f32 %v521, %v523
    %v526 = vlaneseq
    %v527 = vshrl.u32 %v526, 7
    %v528 = vsub.s32 0, %v527
    %v529 = vrot.slane %v524, %v528
    %v531 = vmul.f32 %v329, %v529
    %v532 = vmul.f32 %v332, %v529
    %v533 = vmul.f32 %v337, %v529
    %v534 = vmul.f32 %v340, %v529
    %v535 = vmul.f32 %v345, %v529
    %v536 = vmul.f32 %v348, %v529
    %v537 = vmul.f32 %v353, %v529
    %v538 = vmul.f32 %v356, %v529
    %v539 = vmul.f32 %v361, %v529
    %v540 = vmul.f32 %v364, %v529
    %v541 = vmul.f32 %v369, %v529
    %v542 = vmul.f32 %v372, %v529
    %v543 = vmul.f32 %v377, %v529
    %v544 = vmul.f32 %v380, %v529
    %v545 = vmul.f32 %v385, %v529
    %v546 = vmul.f32 %v388, %v529
    %v547 = vmul.f32 %v393, %v529
    %v548 = vmul.f32 %v396, %v529
    %v549 = vld [vmem:[%s4] sm:$0x1]
    %v550 = vmul.f32 %v442, %v524
    %v551 = vsub.f32 %v549, %v550
    %v553 = vlaneseq
    %v554 = vshrl.u32 %v553, 7
    %v555 = vsub.s32 0, %v554
    %v556 = vrot.slane %v551, %v555
    %v558 = vadd.f32 %v531, %v556
    %v559 = vadd.f32 %v532, %v556
    %v560 = vadd.f32 %v533, %v556
    %v561 = vadd.f32 %v534, %v556
    %v562 = vadd.f32 %v535, %v556
    %v563 = vadd.f32 %v536, %v556
    %v564 = vadd.f32 %v537, %v556
    %v565 = vadd.f32 %v538, %v556
    %v566 = vadd.f32 %v539, %v556
    %v567 = vadd.f32 %v540, %v556
    %v568 = vadd.f32 %v541, %v556
    %v569 = vadd.f32 %v542, %v556
    %v570 = vadd.f32 %v543, %v556
    %v571 = vadd.f32 %v544, %v556
    %v572 = vadd.f32 %v545, %v556
    %v573 = vadd.f32 %v546, %v556
    %v574 = vadd.f32 %v547, %v556
    %v575 = vadd.f32 %v548, %v556
    %v576 = vmax.f32 %v558, 0.0
    %v577 = vmax.f32 %v559, 0.0
    %v578 = vmax.f32 %v560, 0.0
    %v579 = vmax.f32 %v561, 0.0
    %v580 = vmax.f32 %v562, 0.0
    %v581 = vmax.f32 %v563, 0.0
    %v582 = vmax.f32 %v564, 0.0
    %v583 = vmax.f32 %v565, 0.0
    %v584 = vmax.f32 %v566, 0.0
    %v585 = vmax.f32 %v567, 0.0
    %v586 = vmax.f32 %v568, 0.0
    %v587 = vmax.f32 %v569, 0.0
    %v588 = vmax.f32 %v570, 0.0
    %v589 = vmax.f32 %v571, 0.0
    %v590 = vmax.f32 %v572, 0.0
    %v591 = vmax.f32 %v573, 0.0
    %v592 = vmax.f32 %v574, 0.0
    %v593 = vmax.f32 %v575, 0.0
    %v595 = vrot.slane %v576, 4
    %596 = vrot.lane.b32.xlu0 %v595, 16
    %v597 = vpop.permute.xlu0 %596
    %600 = vrot.lane.b32.xlu0 %v577, 32
    %v601 = vpop.permute.xlu0 %600
    %v603 = vrot.slane %v577, 4
    %604 = vrot.lane.b32.xlu0 %v603, 48
    %v605 = vpop.permute.xlu0 %604
    %608 = vrot.lane.b32.xlu0 %v579, 64
    %v609 = vpop.permute.xlu0 %608
    %v611 = vrot.slane %v579, 4
    %612 = vrot.lane.b32.xlu0 %v611, 80
    %v613 = vpop.permute.xlu0 %612
    %616 = vrot.lane.b32.xlu0 %v580, 96
    %v617 = vpop.permute.xlu0 %616
    %v619 = vrot.slane %v580, 4
    %620 = vrot.lane.b32.xlu0 %v619, 112
    %v621 = vpop.permute.xlu0 %620
    %v624 = vrot.slane %v582, 4
    %625 = vrot.lane.b32.xlu0 %v624, 16
    %v626 = vpop.permute.xlu0 %625
    %629 = vrot.lane.b32.xlu0 %v583, 32
    %v630 = vpop.permute.xlu0 %629
    %v632 = vrot.slane %v583, 4
    %633 = vrot.lane.b32.xlu0 %v632, 48
    %v634 = vpop.permute.xlu0 %633
    %637 = vrot.lane.b32.xlu0 %v585, 64
    %v638 = vpop.permute.xlu0 %637
    %v640 = vrot.slane %v585, 4
    %641 = vrot.lane.b32.xlu0 %v640, 80
    %v642 = vpop.permute.xlu0 %641
    %645 = vrot.lane.b32.xlu0 %v586, 96
    %v646 = vpop.permute.xlu0 %645
    %v648 = vrot.slane %v586, 4
    %649 = vrot.lane.b32.xlu0 %v648, 112
    %v650 = vpop.permute.xlu0 %649
    %v652 = vsel %vm399, %v576, %v597
    %vm653 = vcmask 261120
    %v654 = vsel %vm653, %v652, %v601
    %vm655 = vcmask 392192
    %v656 = vsel %vm655, %v654, %v605
    %vm657 = vcmask 523264
    %v658 = vsel %vm657, %v656, %v609
    %vm659 = vcmask 654336
    %v660 = vsel %vm659, %v658, %v613
    %vm661 = vcmask 785408
    %v662 = vsel %vm661, %v660, %v617
    %vm663 = vcmask 916480
    %v664 = vsel %vm663, %v662, %v621
    %v665 = vsel %vm399, %v582, %v626
    %v666 = vsel %vm653, %v665, %v630
    %v667 = vsel %vm655, %v666, %v634
    %v668 = vsel %vm657, %v667, %v638
    %v669 = vsel %vm659, %v668, %v642
    %v670 = vsel %vm661, %v669, %v646
    %v671 = vsel %vm663, %v670, %v650
    %672 = vrot.lane.b32.xlu0 %v603, 16
    %v673 = vpop.permute.xlu0 %672
    %676 = vrot.lane.b32.xlu0 %v578, 32
    %v677 = vpop.permute.xlu0 %676
    %v679 = vrot.slane %v578, 4
    %680 = vrot.lane.b32.xlu0 %v679, 48
    %v681 = vpop.permute.xlu0 %680
    %683 = vrot.lane.b32.xlu0 %v580, 64
    %v684 = vpop.permute.xlu0 %683
    %686 = vrot.lane.b32.xlu0 %v619, 80
    %v687 = vpop.permute.xlu0 %686
    %690 = vrot.lane.b32.xlu0 %v581, 96
    %v691 = vpop.permute.xlu0 %690
    %v693 = vrot.slane %v581, 4
    %694 = vrot.lane.b32.xlu0 %v693, 112
    %v695 = vpop.permute.xlu0 %694
    %697 = vrot.lane.b32.xlu0 %v632, 16
    %v698 = vpop.permute.xlu0 %697
    %701 = vrot.lane.b32.xlu0 %v584, 32
    %v702 = vpop.permute.xlu0 %701
    %v704 = vrot.slane %v584, 4
    %705 = vrot.lane.b32.xlu0 %v704, 48
    %v706 = vpop.permute.xlu0 %705
    %708 = vrot.lane.b32.xlu0 %v586, 64
    %v709 = vpop.permute.xlu0 %708
    %711 = vrot.lane.b32.xlu0 %v648, 80
    %v712 = vpop.permute.xlu0 %711
    %715 = vrot.lane.b32.xlu0 %v587, 96
    %v716 = vpop.permute.xlu0 %715
    %v718 = vrot.slane %v587, 4
    %719 = vrot.lane.b32.xlu0 %v718, 112
    %v720 = vpop.permute.xlu0 %719
    %v722 = vsel %vm399, %v577, %v673
    %v723 = vsel %vm653, %v722, %v677
    %v724 = vsel %vm655, %v723, %v681
    %v725 = vsel %vm657, %v724, %v684
    %v726 = vsel %vm659, %v725, %v687
    %v727 = vsel %vm661, %v726, %v691
    %v728 = vsel %vm663, %v727, %v695
    %v729 = vsel %vm399, %v583, %v698
    %v730 = vsel %vm653, %v729, %v702
    %v731 = vsel %vm655, %v730, %v706
    %v732 = vsel %vm657, %v731, %v709
    %v733 = vsel %vm659, %v732, %v712
    %v734 = vsel %vm661, %v733, %v716
    %v735 = vsel %vm663, %v734, %v720
    %v737 = vrot.slane %v588, 4
    %738 = vrot.lane.b32.xlu0 %v737, 16
    %v739 = vpop.permute.xlu0 %738
    %742 = vrot.lane.b32.xlu0 %v589, 32
    %v743 = vpop.permute.xlu0 %742
    %v745 = vrot.slane %v589, 4
    %746 = vrot.lane.b32.xlu0 %v745, 48
    %v747 = vpop.permute.xlu0 %746
    %750 = vrot.lane.b32.xlu0 %v591, 64
    %v751 = vpop.permute.xlu0 %750
    %v753 = vrot.slane %v591, 4
    %754 = vrot.lane.b32.xlu0 %v753, 80
    %v755 = vpop.permute.xlu0 %754
    %758 = vrot.lane.b32.xlu0 %v592, 96
    %v759 = vpop.permute.xlu0 %758
    %v761 = vrot.slane %v592, 4
    %762 = vrot.lane.b32.xlu0 %v761, 112
    %v763 = vpop.permute.xlu0 %762
    %v765 = vsel %vm399, %v588, %v739
    %v766 = vsel %vm653, %v765, %v743
    %v767 = vsel %vm655, %v766, %v747
    %v768 = vsel %vm657, %v767, %v751
    %v769 = vsel %vm659, %v768, %v755
    %v770 = vsel %vm661, %v769, %v759
    %v771 = vsel %vm663, %v770, %v763
    %772 = vrot.lane.b32.xlu0 %v745, 16
    %v773 = vpop.permute.xlu0 %772
    %776 = vrot.lane.b32.xlu0 %v590, 32
    %v777 = vpop.permute.xlu0 %776
    %v779 = vrot.slane %v590, 4
    %780 = vrot.lane.b32.xlu0 %v779, 48
    %v781 = vpop.permute.xlu0 %780
    %783 = vrot.lane.b32.xlu0 %v592, 64
    %v784 = vpop.permute.xlu0 %783
    %786 = vrot.lane.b32.xlu0 %v761, 80
    %v787 = vpop.permute.xlu0 %786
    %790 = vrot.lane.b32.xlu0 %v593, 96
    %v791 = vpop.permute.xlu0 %790
    %v793 = vrot.slane %v593, 4
    %794 = vrot.lane.b32.xlu0 %v793, 112
    %v795 = vpop.permute.xlu0 %794
    %v797 = vsel %vm399, %v589, %v773
    %v798 = vsel %vm653, %v797, %v777
    %v799 = vsel %vm655, %v798, %v781
    %v800 = vsel %vm657, %v799, %v784
    %v801 = vsel %vm659, %v800, %v787
    %v802 = vsel %vm661, %v801, %v791
    %v803 = vsel %vm663, %v802, %v795
    %v806 = vrot.slane %v728, 4
    %v807 = vrot.slane %v735, 4
    %v811 = vrot.slane %v803, 4
    %vm813 = vcmask 1043456
    %v814 = vsel %vm813, %v664, %v806
    %v815 = vsel %vm813, %v671, %v807
    %v816 = vsel %vm813, %v771, %v811
    %v817 = vpack.c.bf16 %v815, %v814
    %v818 = vpack.c.bf16 %v816, %v815
    %v819 = vld [vmem:[%s5] sm:$0xf]
    %v820 = vld [vmem:[%s5 + $0x4] sm:$0xf]
    %v821 = vld [vmem:[%s5 + $0x8] sm:$0xf]
    %v822 = vld [vmem:[%s5 + $0xc] sm:$0xf]
    %v823 = vld [vmem:[%s5 + $0x10] sm:$0xf]
    %v824 = vld [vmem:[%s5 + $0x14] sm:$0xf]
    %v825 = vld [vmem:[%s5 + $0x18] sm:$0xf]
    %v826 = vld [vmem:[%s5 + $0x1c] sm:$0xf]
    %v827 = vld [vmem:[%s5 + $0x20] sm:$0xf]
    %v828 = vld [vmem:[%s5 + $0x24] sm:$0xf]
    %v829 = vld [vmem:[%s5 + $0x28] sm:$0xf]
    %v830 = vld [vmem:[%s5 + $0x2c] sm:$0xf]
    %v831 = vld [vmem:[%s5 + $0x30] sm:$0xf]
    %v832 = vld [vmem:[%s5 + $0x34] sm:$0xf]
    %v833 = vld [vmem:[%s5 + $0x38] sm:$0xf]
    %v834 = vld [vmem:[%s5 + $0x3c] sm:$0xf]
    %v835 = vld [vmem:[%s5 + $0x40] sm:$0xf]
    %v836 = vld [vmem:[%s5 + $0x44] sm:$0xf]
    %v837 = vld [vmem:[%s5 + $0x48] sm:$0xf]
    %v838 = vld [vmem:[%s5 + $0x4c] sm:$0xf]
    %v839 = vld [vmem:[%s5 + $0x50] sm:$0xf]
    %v840 = vld [vmem:[%s5 + $0x54] sm:$0xf]
    %v841 = vld [vmem:[%s5 + $0x58] sm:$0xf]
    %v842 = vld [vmem:[%s5 + $0x5c] sm:$0xf]
    %v843 = vld [vmem:[%s5 + $0x60] sm:$0xf]
    %v844 = vld [vmem:[%s5 + $0x64] sm:$0xf]
    %v845 = vld [vmem:[%s5 + $0x68] sm:$0xf]
    %v846 = vld [vmem:[%s5 + $0x6c] sm:$0xf]
    %v847 = vld [vmem:[%s5 + $0x70] sm:$0xf]
    %v848 = vld [vmem:[%s5 + $0x74] sm:$0xf]
    %v849 = vld [vmem:[%s5 + $0x78] sm:$0xf]
    %v850 = vld [vmem:[%s5 + $0x7c] sm:$0xf]
    %v883 = vunpack.c.l.b16 %v819
    %v884 = vunpack.c.l.b16 %v820
    %v885 = vunpack.c.l.b16 %v821
    %v886 = vunpack.c.l.b16 %v822
    %v887 = vunpack.c.l.b16 %v823
    %v888 = vunpack.c.l.b16 %v824
    %v889 = vunpack.c.l.b16 %v825
    %v890 = vunpack.c.l.b16 %v826
    %v891 = vunpack.c.l.b16 %v827
    %v892 = vunpack.c.l.b16 %v828
    %v893 = vunpack.c.l.b16 %v829
    %v894 = vunpack.c.l.b16 %v830
    %v895 = vunpack.c.l.b16 %v831
    %v896 = vunpack.c.l.b16 %v832
    %v897 = vunpack.c.l.b16 %v833
    %v898 = vunpack.c.l.b16 %v834
    %v899 = vunpack.c.l.b16 %v835
    %v900 = vunpack.c.l.b16 %v836
    %v901 = vunpack.c.l.b16 %v837
    %v902 = vunpack.c.l.b16 %v838
    %v903 = vunpack.c.l.b16 %v839
    %v904 = vunpack.c.l.b16 %v840
    %v905 = vunpack.c.l.b16 %v841
    %v906 = vunpack.c.l.b16 %v842
    %v907 = vunpack.c.l.b16 %v843
    %v908 = vunpack.c.l.b16 %v844
    %v909 = vunpack.c.l.b16 %v845
    %v910 = vunpack.c.l.b16 %v846
    %v911 = vunpack.c.l.b16 %v847
    %v912 = vunpack.c.l.b16 %v848
    %v913 = vunpack.c.l.b16 %v849
    %v914 = vunpack.c.l.b16 %v850
    %v915 = vpack.c.b16 %v884, %v883
    %v916 = vpack.c.b16 %v886, %v885
    %v917 = vpack.c.b16 %v888, %v887
    %v918 = vpack.c.b16 %v890, %v889
    %v919 = vpack.c.b16 %v892, %v891
    %v920 = vpack.c.b16 %v894, %v893
    %v921 = vpack.c.b16 %v896, %v895
    %v922 = vpack.c.b16 %v898, %v897
    %v923 = vpack.c.b16 %v900, %v899
    %v924 = vpack.c.b16 %v902, %v901
    %v925 = vpack.c.b16 %v904, %v903
    %v926 = vpack.c.b16 %v906, %v905
    %v927 = vpack.c.b16 %v908, %v907
    %v928 = vpack.c.b16 %v910, %v909
    %v929 = vpack.c.b16 %v912, %v911
    %v930 = vpack.c.b16 %v914, %v913
    %947 = vmatprep.subr.bf16.mxu0 0
    %948 = vmatpush1.bf16.msra.mxu0 %v915
    %949 = vmatprep.subr.bf16.mxu0 0
    %950 = vmatpush1.bf16.msra.mxu0 %v916
    %951 = vmatprep.subr.bf16.mxu0 0
    %952 = vmatpush1.bf16.msra.mxu0 %v917
    %953 = vmatprep.subr.bf16.mxu0 0
    %954 = vmatpush1.bf16.msra.mxu0 %v918
    %955 = vmatprep.subr.bf16.mxu0 0
    %956 = vmatpush1.bf16.msra.mxu0 %v919
    %957 = vmatprep.subr.bf16.mxu0 0
    %958 = vmatpush1.bf16.msra.mxu0 %v920
    %959 = vmatprep.subr.bf16.mxu0 0
    %960 = vmatpush1.bf16.msra.mxu0 %v921
    %961 = vmatprep.subr.bf16.mxu0 0
    %962 = vmatpush1.bf16.msra.mxu0 %v922
    %963 = vmatprep.subr.bf16.mxu0 0
    %964 = vmatpush1.bf16.msra.mxu0 %v923
    %965 = vmatprep.subr.bf16.mxu0 0
    %966 = vmatpush1.bf16.msra.mxu0 %v924
    %967 = vmatprep.subr.bf16.mxu0 0
    %968 = vmatpush1.bf16.msra.mxu0 %v925
    %969 = vmatprep.subr.bf16.mxu0 0
    %970 = vmatpush1.bf16.msra.mxu0 %v926
    %971 = vmatprep.subr.bf16.mxu0 0
    %972 = vmatpush1.bf16.msra.mxu0 %v927
    %973 = vmatprep.subr.bf16.mxu0 0
    %974 = vmatpush1.bf16.msra.mxu0 %v928
    %975 = vmatprep.subr.bf16.mxu0 0
    %976 = vmatpush1.bf16.msra.mxu0 %v929
    %977 = vmatprep.subr.bf16.mxu0 0
    %978 = vmatpush1.bf16.msra.mxu0 %v930
    %979 = vmatprep.mubr.bf16.mxu0 %v818
    %980 = vmatmul.mubr.bf16.gmra.mrb[0].mxu0 %v817
    %v981 = vpop.f32.mrb[0].mxu0
    %v982 = vadd.f32 0.0, %v981
    %v983 = vpop.f32.mrb[0].mxu0
    %v984 = vpop.f32.mrb[0].mxu0
    %v985 = vadd.f32 0.0, %v984
    %v986 = vpop.f32.mrb[0].mxu0
    %987 = vdwg.mxu0
    %v988 = vsel %vm653, %v982, 0.0
    %v989 = vsel %vm653, %v985, 0.0
    %v990 = vadd.f32 %v988, %v989
    %v991 = vrot.slane %v990, 4
    %v992 = vadd.f32 %v990, %v991
    %v993 = vrot.slane %v992, 2
    %v994 = vadd.f32 %v992, %v993
    %v995 = vrot.slane %v994, 1
    %v996 = vadd.f32 %v994, %v995
    %v997 = vrcp.pop 16.0
    %v998 = vmul.f32 %v996, %v997
    %v999 = vsub.f32 %v982, %v998
    %v1000 = vsub.f32 %v985, %v998
    %v1001 = vmul.f32 %v999, %v999
    %v1002 = vmul.f32 %v1000, %v1000
    %v1003 = vsel %vm653, %v1001, 0.0
    %v1004 = vsel %vm653, %v1002, 0.0
    %v1005 = vadd.f32 %v1003, %v1004
    %v1006 = vrot.slane %v1005, 4
    %v1007 = vadd.f32 %v1005, %v1006
    %v1008 = vrot.slane %v1007, 2
    %v1009 = vadd.f32 %v1007, %v1008
    %v1010 = vrot.slane %v1009, 1
    %v1011 = vadd.f32 %v1009, %v1010
    %v1012 = vmul.f32 %v1011, %v997
    %v1013 = vld [vmem:[%s6] sm:$0x1]
    %v1014 = vadd.f32 %v1012, 1e-05
    %v1015 = vrsqrt.pop %v1014
    %v1016 = vmul.f32 %v1013, %v1015
    %v1018 = vlaneseq
    %v1019 = vshrl.u32 %v1018, 7
    %v1020 = vsub.s32 0, %v1019
    %v1021 = vrot.slane %v1016, %v1020
    %v1023 = vmul.f32 %v982, %v1021
    %v1024 = vmul.f32 %v985, %v1021
    %v1025 = vld [vmem:[%s7] sm:$0x1]
    %v1026 = vmul.f32 %v998, %v1016
    %v1027 = vsub.f32 %v1025, %v1026
    %v1029 = vlaneseq
    %v1030 = vshrl.u32 %v1029, 7
    %v1031 = vsub.s32 0, %v1030
    %v1032 = vrot.slane %v1027, %v1031
    %v1034 = vadd.f32 %v1023, %v1032
    %v1035 = vadd.f32 %v1024, %v1032
    %v1036 = vmax.f32 %v1034, 0.0
    %v1037 = vmax.f32 %v1035, 0.0
    %v1038 = vld [vmem:[%s1] sm:$0xf]
    %1040 = vrot.lane.b32.xlu0 %v1036, 16
    %v1041 = vpop.permute.xlu0 %1040
    %v1043 = vrot.slane %v1036, 4
    %1044 = vrot.lane.b32.xlu0 %v1043, 48
    %v1045 = vpop.permute.xlu0 %1044
    %1048 = vrot.lane.b32.xlu0 %v1037, 80
    %v1049 = vpop.permute.xlu0 %1048
    %v1051 = vrot.slane %v1037, 4
    %1052 = vrot.lane.b32.xlu0 %v1051, 112
    %v1053 = vpop.permute.xlu0 %1052
    %v1055 = vsel %vm399, %v1038, %v1041
    %v1056 = vsel %vm655, %v1055, %v1045
    %v1057 = vsel %vm659, %v1056, %v1049
    %v1058 = vsel %vm663, %v1057, %v1053
    %v1059 = vpack.c.bf16 %v1058, %v1058
    %v1060 = vpack.c.bf16 %v1053, %v1053
    %v1061 = vld [vmem:[%s8] sm:$0xff]
    %v1062 = vld [vmem:[%s8 + $0x8] sm:$0xff]
    %v1063 = vld [vmem:[%s8 + $0x10] sm:$0xff]
    %v1064 = vld [vmem:[%s8 + $0x18] sm:$0xff]
    %v1065 = vld [vmem:[%s8 + $0x20] sm:$0xff]
    %v1066 = vld [vmem:[%s8 + $0x28] sm:$0xff]
    %v1067 = vld [vmem:[%s8 + $0x30] sm:$0xff]
    %v1068 = vld [vmem:[%s8 + $0x38] sm:$0xff]
    %v1069 = vld [vmem:[%s8 + $0x40] sm:$0xff]
    %v1070 = vld [vmem:[%s8 + $0x48] sm:$0xff]
    %v1071 = vld [vmem:[%s8 + $0x50] sm:$0xff]
    %v1072 = vld [vmem:[%s8 + $0x58] sm:$0xff]
    %v1073 = vld [vmem:[%s8 + $0x60] sm:$0xff]
    %v1074 = vld [vmem:[%s8 + $0x68] sm:$0xff]
    %v1075 = vld [vmem:[%s8 + $0x70] sm:$0xff]
    %v1076 = vld [vmem:[%s8 + $0x78] sm:$0xff]
    %v1077 = vld [vmem:[%s8 + $0x80] sm:$0xff]
    %v1078 = vld [vmem:[%s8 + $0x88] sm:$0xff]
    %v1097 = vunpack.c.l.b16 %v1061
    %v1098 = vunpack.c.h.b16 %v1061
    %v1099 = vunpack.c.l.b16 %v1062
    %v1100 = vunpack.c.h.b16 %v1062
    %v1101 = vunpack.c.l.b16 %v1063
    %v1102 = vunpack.c.h.b16 %v1063
    %v1103 = vunpack.c.l.b16 %v1064
    %v1104 = vunpack.c.h.b16 %v1064
    %v1105 = vunpack.c.l.b16 %v1065
    %v1106 = vunpack.c.h.b16 %v1065
    %v1107 = vunpack.c.l.b16 %v1066
    %v1108 = vunpack.c.h.b16 %v1066
    %v1109 = vunpack.c.l.b16 %v1067
    %v1110 = vunpack.c.h.b16 %v1067
    %v1111 = vunpack.c.l.b16 %v1068
    %v1112 = vunpack.c.h.b16 %v1068
    %v1113 = vunpack.c.l.b16 %v1069
    %v1114 = vunpack.c.h.b16 %v1069
    %v1115 = vunpack.c.l.b16 %v1070
    %v1116 = vunpack.c.h.b16 %v1070
    %v1117 = vunpack.c.l.b16 %v1071
    %v1118 = vunpack.c.h.b16 %v1071
    %v1119 = vunpack.c.l.b16 %v1072
    %v1120 = vunpack.c.h.b16 %v1072
    %v1121 = vunpack.c.l.b16 %v1073
    %v1122 = vunpack.c.h.b16 %v1073
    %v1123 = vunpack.c.l.b16 %v1074
    %v1124 = vunpack.c.h.b16 %v1074
    %v1125 = vunpack.c.l.b16 %v1075
    %v1126 = vunpack.c.h.b16 %v1075
    %v1127 = vunpack.c.l.b16 %v1076
    %v1128 = vunpack.c.h.b16 %v1076
    %v1129 = vunpack.c.l.b16 %v1077
    %v1130 = vunpack.c.h.b16 %v1077
    %v1131 = vunpack.c.l.b16 %v1078
    %v1132 = vunpack.c.h.b16 %v1078
    %v1133 = vpack.c.b16 %v1099, %v1097
    %v1134 = vpack.c.b16 %v1100, %v1098
    %v1135 = vpack.c.b16 %v1103, %v1101
    %v1136 = vpack.c.b16 %v1104, %v1102
    %v1137 = vpack.c.b16 %v1107, %v1105
    %v1138 = vpack.c.b16 %v1108, %v1106
    %v1139 = vpack.c.b16 %v1111, %v1109
    %v1140 = vpack.c.b16 %v1112, %v1110
    %v1141 = vpack.c.b16 %v1115, %v1113
    %v1142 = vpack.c.b16 %v1116, %v1114
    %v1143 = vpack.c.b16 %v1119, %v1117
    %v1144 = vpack.c.b16 %v1120, %v1118
    %v1145 = vpack.c.b16 %v1123, %v1121
    %v1146 = vpack.c.b16 %v1124, %v1122
    %v1147 = vpack.c.b16 %v1127, %v1125
    %v1148 = vpack.c.b16 %v1128, %v1126
    %v1149 = vpack.c.b16 %v1131, %v1129
    %v1150 = vpack.c.b16 %v1132, %v1130
    %v1170 = vsel %vm399, %v1060, 0
    %1172 = vmatprep.subr.bf16.mxu0 %v1134
    %1173 = vmatpush1.bf16.msra.mxu0 %v1133
    %1174 = vmatprep.subr.bf16.mxu0 %v1136
    %1175 = vmatpush1.bf16.msra.mxu0 %v1135
    %1176 = vmatprep.subr.bf16.mxu0 %v1138
    %1177 = vmatpush1.bf16.msra.mxu0 %v1137
    %1178 = vmatprep.subr.bf16.mxu0 %v1140
    %1179 = vmatpush1.bf16.msra.mxu0 %v1139
    %1180 = vmatprep.subr.bf16.mxu0 %v1142
    %1181 = vmatpush1.bf16.msra.mxu0 %v1141
    %1182 = vmatprep.subr.bf16.mxu0 %v1144
    %1183 = vmatpush1.bf16.msra.mxu0 %v1143
    %1184 = vmatprep.subr.bf16.mxu0 %v1146
    %1185 = vmatpush1.bf16.msra.mxu0 %v1145
    %1186 = vmatprep.subr.bf16.mxu0 %v1148
    %1187 = vmatpush1.bf16.msra.mxu0 %v1147
    %1188 = vmatprep.subr.bf16.mxu0 %v1150
    %1189 = vmatpush1.bf16.msra.mxu0 %v1149
    %1190 = vmatprep.subr.bf16.mxu0 0
    %1191 = vmatpush1.bf16.msra.mxu0 0
    %1192 = vmatprep.subr.bf16.mxu0 0
    %1193 = vmatpush1.bf16.msra.mxu0 0
    %1194 = vmatprep.subr.bf16.mxu0 0
    %1195 = vmatpush1.bf16.msra.mxu0 0
    %1196 = vmatprep.subr.bf16.mxu0 0
    %1197 = vmatpush1.bf16.msra.mxu0 0
    %1198 = vmatprep.subr.bf16.mxu0 0
    %1199 = vmatpush1.bf16.msra.mxu0 0
    %1200 = vmatprep.subr.bf16.mxu0 0
    %1201 = vmatpush1.bf16.msra.mxu0 0
    %1202 = vmatprep.subr.bf16.mxu0 0
    %1203 = vmatpush1.bf16.msra.mxu0 0
    %1204 = vmatprep.mubr.bf16.mxu0 %v1170
    %1205 = vmatmul.mubr.bf16.gmra.mrb[0].mxu0 %v1059
    %v1206 = vpop.f32.mrb[0].mxu0
    %v1207 = vadd.f32 0.0, %v1206
    %v1208 = vpop.f32.mrb[0].mxu0
    %v1209 = vadd.f32 0.0, %v1208
    %v1210 = vpop.f32.mrb[0].mxu0
    %v1211 = vpop.f32.mrb[0].mxu0
    %1212 = vdwg.mxu0
    %v1213 = vsel %vm813, %v1207, 0.0
    %v1214 = vrot.slane %v1213, 4
    %v1215 = vadd.f32 %v1213, %v1214
    %v1216 = vrot.slane %v1215, 2
    %v1217 = vadd.f32 %v1215, %v1216
    %v1218 = vrot.slane %v1217, 1
    %v1219 = vadd.f32 %v1217, %v1218
    %v1220 = vsel %vm813, %v1209, 0.0
    %v1221 = vrot.slane %v1220, 4
    %v1222 = vadd.f32 %v1220, %v1221
    %v1223 = vrot.slane %v1222, 2
    %v1224 = vadd.f32 %v1222, %v1223
    %v1225 = vrot.slane %v1224, 1
    %v1226 = vadd.f32 %v1224, %v1225
    %v1227 = vrcp.pop 4.0
    %v1228 = vmul.f32 %v1219, %v1227
    %v1229 = vmul.f32 %v1226, %v1227
    %v1230 = vsub.f32 %v1207, %v1228
    %v1231 = vsub.f32 %v1209, %v1229
    %v1232 = vmul.f32 %v1230, %v1230
    %v1233 = vmul.f32 %v1231, %v1231
    %v1234 = vsel %vm813, %v1232, 0.0
    %v1235 = vrot.slane %v1234, 4
    %v1236 = vadd.f32 %v1234, %v1235
    %v1237 = vrot.slane %v1236, 2
    %v1238 = vadd.f32 %v1236, %v1237
    %v1239 = vrot.slane %v1238, 1
    %v1240 = vadd.f32 %v1238, %v1239
    %v1241 = vsel %vm813, %v1233, 0.0
    %v1242 = vrot.slane %v1241, 4
    %v1243 = vadd.f32 %v1241, %v1242
    %v1244 = vrot.slane %v1243, 2
    %v1245 = vadd.f32 %v1243, %v1244
    %v1246 = vrot.slane %v1245, 1
    %v1247 = vadd.f32 %v1245, %v1246
    %v1248 = vmul.f32 %v1240, %v1227
    %v1249 = vmul.f32 %v1247, %v1227
    %v1250 = vld [vmem:[%s9] sm:$0x3]
    %v1251 = vadd.f32 %v1248, 1e-05
    %v1252 = vadd.f32 %v1249, 1e-05
    %v1253 = vrsqrt.pop %v1251
    %v1254 = vrsqrt.pop %v1252
    %v1257 = vcombine.low %v1253, %v1254
    %v1259 = vunpack.c.l.s4 1966171168
    %v1260 = vunpack.c.0.s8 %v1259
    %v1261 = vlaneseq
    %v1262 = vshrl.u32 %v1261, 7
    %v1263 = vsub.s32 %v1260, %v1262
    %v1264 = vrot.slane %v1257, %v1263
    %v1266 = vunpack.c.l.s4 1966171168
    %v1267 = vunpack.c.0.s8 %v1266
    %v1268 = vlaneseq
    %v1269 = vshrl.u32 %v1268, 7
    %v1270 = vsub.s32 %v1267, %v1269
    %v1271 = vrot.slane %v1264, %v1270
    %v1273 = vmul.f32 %v1250, %v1271
    %v1275 = vlaneseq
    %v1276 = vshrl.u32 %v1275, 7
    %v1277 = vsub.s32 0, %v1276
    %v1278 = vrot.slane %v1273, %v1277
    %v1279 = vlaneseq
    %v1280 = vshrl.u32 %v1279, 7
    %v1281 = vsub.s32 1, %v1280
    %v1282 = vrot.slane %v1273, %v1281
    %v1285 = vmul.f32 %v1207, %v1278
    %v1286 = vmul.f32 %v1209, %v1282
    %v1287 = vld [vmem:[%s10] sm:$0x3]
    %v1288 = vmul.f32 %v1228, %v1278
    %v1289 = vmul.f32 %v1229, %v1282
    %v1292 = vcombine.low %v1288, %v1289
    %v1294 = vunpack.c.l.s4 1966171168
    %v1295 = vunpack.c.0.s8 %v1294
    %v1296 = vlaneseq
    %v1297 = vshrl.u32 %v1296, 7
    %v1298 = vsub.s32 %v1295, %v1297
    %v1299 = vrot.slane %v1292, %v1298
    %v1301 = vunpack.c.l.s4 1966171168
    %v1302 = vunpack.c.0.s8 %v1301
    %v1303 = vlaneseq
    %v1304 = vshrl.u32 %v1303, 7
    %v1305 = vsub.s32 %v1302, %v1304
    %v1306 = vrot.slane %v1299, %v1305
    %v1308 = vsub.f32 %v1287, %v1306
    %v1310 = vlaneseq
    %v1311 = vshrl.u32 %v1310, 7
    %v1312 = vsub.s32 0, %v1311
    %v1313 = vrot.slane %v1308, %v1312
    %v1314 = vlaneseq
    %v1315 = vshrl.u32 %v1314, 7
    %v1316 = vsub.s32 1, %v1315
    %v1317 = vrot.slane %v1308, %v1316
    %v1320 = vadd.f32 %v1285, %v1313
    %v1321 = vadd.f32 %v1286, %v1317
    %v1322 = vmax.f32 %v1320, 0.0
    %v1323 = vmax.f32 %v1321, 0.0
    %v1324 = vpack.c.bf16 %v1322, %v1322
    %v1325 = vpack.c.bf16 %v1323, %v1323
    %v1326 = vld [vmem:[%s11] sm:$0xf]
    %v1327 = vld [vmem:[%s11 + $0x4] sm:$0xf]
    %v1328 = vld [vmem:[%s11 + $0x8] sm:$0xf]
    %v1329 = vld [vmem:[%s11 + $0xc] sm:$0xf]
    %v1330 = vld [vmem:[%s11 + $0x10] sm:$0xf]
    %v1331 = vld [vmem:[%s11 + $0x14] sm:$0xf]
    %v1332 = vld [vmem:[%s11 + $0x18] sm:$0xf]
    %v1333 = vld [vmem:[%s11 + $0x1c] sm:$0xf]
    %v1334 = vld [vmem:[%s11 + $0x20] sm:$0xf]
    %v1335 = vld [vmem:[%s11 + $0x24] sm:$0xf]
    %v1336 = vld [vmem:[%s11 + $0x28] sm:$0xf]
    %v1337 = vld [vmem:[%s11 + $0x2c] sm:$0xf]
    %v1338 = vld [vmem:[%s11 + $0x30] sm:$0xf]
    %v1339 = vld [vmem:[%s11 + $0x34] sm:$0xf]
    %v1340 = vld [vmem:[%s11 + $0x38] sm:$0xf]
    %v1341 = vld [vmem:[%s11 + $0x3c] sm:$0xf]
    %v1342 = vld [vmem:[%s11 + $0x40] sm:$0xf]
    %v1343 = vld [vmem:[%s11 + $0x44] sm:$0xf]
    %v1344 = vld [vmem:[%s11 + $0x48] sm:$0xf]
    %v1345 = vld [vmem:[%s11 + $0x4c] sm:$0xf]
    %v1346 = vld [vmem:[%s11 + $0x50] sm:$0xf]
    %v1347 = vld [vmem:[%s11 + $0x54] sm:$0xf]
    %v1348 = vld [vmem:[%s11 + $0x58] sm:$0xf]
    %v1349 = vld [vmem:[%s11 + $0x5c] sm:$0xf]
    %v1350 = vld [vmem:[%s11 + $0x60] sm:$0xf]
    %v1351 = vld [vmem:[%s11 + $0x64] sm:$0xf]
    %v1352 = vld [vmem:[%s11 + $0x68] sm:$0xf]
    %v1353 = vld [vmem:[%s11 + $0x6c] sm:$0xf]
    %v1354 = vld [vmem:[%s11 + $0x70] sm:$0xf]
    %v1355 = vld [vmem:[%s11 + $0x74] sm:$0xf]
    %v1356 = vld [vmem:[%s11 + $0x78] sm:$0xf]
    %v1357 = vld [vmem:[%s11 + $0x7c] sm:$0xf]
    %v1358 = vld [vmem:[%s12] sm:$0x1]
    %v1360 = vlaneseq
    %v1361 = vshrl.u32 %v1360, 7
    %v1362 = vsub.s32 0, %v1361
    %v1363 = vrot.slane %v1358, %v1362
    %v1397 = vunpack.c.l.b16 %v1326
    %v1398 = vunpack.c.l.b16 %v1327
    %v1399 = vunpack.c.l.b16 %v1328
    %v1400 = vunpack.c.l.b16 %v1329
    %v1401 = vunpack.c.l.b16 %v1330
    %v1402 = vunpack.c.l.b16 %v1331
    %v1403 = vunpack.c.l.b16 %v1332
    %v1404 = vunpack.c.l.b16 %v1333
    %v1405 = vunpack.c.l.b16 %v1334
    %v1406 = vunpack.c.l.b16 %v1335
    %v1407 = vunpack.c.l.b16 %v1336
    %v1408 = vunpack.c.l.b16 %v1337
    %v1409 = vunpack.c.l.b16 %v1338
    %v1410 = vunpack.c.l.b16 %v1339
    %v1411 = vunpack.c.l.b16 %v1340
    %v1412 = vunpack.c.l.b16 %v1341
    %v1413 = vunpack.c.l.b16 %v1342
    %v1414 = vunpack.c.l.b16 %v1343
    %v1415 = vunpack.c.l.b16 %v1344
    %v1416 = vunpack.c.l.b16 %v1345
    %v1417 = vunpack.c.l.b16 %v1346
    %v1418 = vunpack.c.l.b16 %v1347
    %v1419 = vunpack.c.l.b16 %v1348
    %v1420 = vunpack.c.l.b16 %v1349
    %v1421 = vunpack.c.l.b16 %v1350
    %v1422 = vunpack.c.l.b16 %v1351
    %v1423 = vunpack.c.l.b16 %v1352
    %v1424 = vunpack.c.l.b16 %v1353
    %v1425 = vunpack.c.l.b16 %v1354
    %v1426 = vunpack.c.l.b16 %v1355
    %v1427 = vunpack.c.l.b16 %v1356
    %v1428 = vunpack.c.l.b16 %v1357
    %v1429 = vpack.c.b16 %v1398, %v1397
    %v1430 = vpack.c.b16 %v1400, %v1399
    %v1431 = vpack.c.b16 %v1402, %v1401
    %v1432 = vpack.c.b16 %v1404, %v1403
    %v1433 = vpack.c.b16 %v1406, %v1405
    %v1434 = vpack.c.b16 %v1408, %v1407
    %v1435 = vpack.c.b16 %v1410, %v1409
    %v1436 = vpack.c.b16 %v1412, %v1411
    %v1437 = vpack.c.b16 %v1414, %v1413
    %v1438 = vpack.c.b16 %v1416, %v1415
    %v1439 = vpack.c.b16 %v1418, %v1417
    %v1440 = vpack.c.b16 %v1420, %v1419
    %v1441 = vpack.c.b16 %v1422, %v1421
    %v1442 = vpack.c.b16 %v1424, %v1423
    %v1443 = vpack.c.b16 %v1426, %v1425
    %v1444 = vpack.c.b16 %v1428, %v1427
    %1461 = vmatprep.subr.bf16.mxu0 0
    %1462 = vmatpush1.bf16.msra.mxu0 %v1429
    %1463 = vmatprep.subr.bf16.mxu0 0
    %1464 = vmatpush1.bf16.msra.mxu0 %v1430
    %1465 = vmatprep.subr.bf16.mxu0 0
    %1466 = vmatpush1.bf16.msra.mxu0 %v1431
    %1467 = vmatprep.subr.bf16.mxu0 0
    %1468 = vmatpush1.bf16.msra.mxu0 %v1432
    %1469 = vmatprep.subr.bf16.mxu0 0
    %1470 = vmatpush1.bf16.msra.mxu0 %v1433
    %1471 = vmatprep.subr.bf16.mxu0 0
    %1472 = vmatpush1.bf16.msra.mxu0 %v1434
    %1473 = vmatprep.subr.bf16.mxu0 0
    %1474 = vmatpush1.bf16.msra.mxu0 %v1435
    %1475 = vmatprep.subr.bf16.mxu0 0
    %1476 = vmatpush1.bf16.msra.mxu0 %v1436
    %1477 = vmatprep.subr.bf16.mxu0 0
    %1478 = vmatpush1.bf16.msra.mxu0 %v1437
    %1479 = vmatprep.subr.bf16.mxu0 0
    %1480 = vmatpush1.bf16.msra.mxu0 %v1438
    %1481 = vmatprep.subr.bf16.mxu0 0
    %1482 = vmatpush1.bf16.msra.mxu0 %v1439
    %1483 = vmatprep.subr.bf16.mxu0 0
    %1484 = vmatpush1.bf16.msra.mxu0 %v1440
    %1485 = vmatprep.subr.bf16.mxu0 0
    %1486 = vmatpush1.bf16.msra.mxu0 %v1441
    %1487 = vmatprep.subr.bf16.mxu0 0
    %1488 = vmatpush1.bf16.msra.mxu0 %v1442
    %1489 = vmatprep.subr.bf16.mxu0 0
    %1490 = vmatpush1.bf16.msra.mxu0 %v1443
    %1491 = vmatprep.subr.bf16.mxu0 0
    %1492 = vmatpush1.bf16.msra.mxu0 %v1444
    %1493 = vmatprep.mubr.bf16.mxu0 %v1325
    %1494 = vmatmul.mubr.bf16.gmra.mrb[0].mxu0 %v1324
    %v1495 = vpop.f32.mrb[0].mxu0
    %v1496 = vadd.f32 %v1363, %v1495
    %v1497 = vpop.f32.mrb[0].mxu0
    %v1498 = vpop.f32.mrb[0].mxu0
    %v1499 = vpop.f32.mrb[0].mxu0
    %1500 = vdwg.mxu0
    %v1501 = vmax.f32 %v1496, 0.0
    %v1502 = vpack.c.bf16 %v1501, %v1501
    %v1503 = vld [vmem:[%s13] sm:$0xff]
    %v1504 = vld [vmem:[%s13 + $0x8] sm:$0xff]
    %v1505 = vld [vmem:[%s13 + $0x10] sm:$0xff]
    %v1506 = vld [vmem:[%s13 + $0x18] sm:$0xff]
    %v1507 = vld [vmem:[%s13 + $0x20] sm:$0xff]
    %v1508 = vld [vmem:[%s13 + $0x28] sm:$0xff]
    %v1509 = vld [vmem:[%s13 + $0x30] sm:$0xff]
    %v1510 = vld [vmem:[%s13 + $0x38] sm:$0xff]
    %v1511 = vld [vmem:[%s13 + $0x40] sm:$0xff]
    %v1512 = vld [vmem:[%s13 + $0x48] sm:$0xff]
    %v1513 = vld [vmem:[%s13 + $0x50] sm:$0xff]
    %v1514 = vld [vmem:[%s13 + $0x58] sm:$0xff]
    %v1515 = vld [vmem:[%s13 + $0x60] sm:$0xff]
    %v1516 = vld [vmem:[%s13 + $0x68] sm:$0xff]
    %v1517 = vld [vmem:[%s13 + $0x70] sm:$0xff]
    %v1518 = vld [vmem:[%s13 + $0x78] sm:$0xff]
    %v1519 = vld [vmem:[%s14] sm:$0x3]
    %v1521 = vlaneseq
    %v1522 = vshrl.u32 %v1521, 7
    %v1523 = vsub.s32 0, %v1522
    %v1524 = vrot.slane %v1519, %v1523
    %v1525 = vlaneseq
    %v1526 = vshrl.u32 %v1525, 7
    %v1527 = vsub.s32 1, %v1526
    %v1528 = vrot.slane %v1519, %v1527
    %v1547 = vunpack.c.l.b16 %v1503
    %v1548 = vunpack.c.h.b16 %v1503
    %v1549 = vunpack.c.l.b16 %v1504
    %v1550 = vunpack.c.h.b16 %v1504
    %v1551 = vunpack.c.l.b16 %v1505
    %v1552 = vunpack.c.h.b16 %v1505
    %v1553 = vunpack.c.l.b16 %v1506
    %v1554 = vunpack.c.h.b16 %v1506
    %v1555 = vunpack.c.l.b16 %v1507
    %v1556 = vunpack.c.h.b16 %v1507
    %v1557 = vunpack.c.l.b16 %v1508
    %v1558 = vunpack.c.h.b16 %v1508
    %v1559 = vunpack.c.l.b16 %v1509
    %v1560 = vunpack.c.h.b16 %v1509
    %v1561 = vunpack.c.l.b16 %v1510
    %v1562 = vunpack.c.h.b16 %v1510
    %v1563 = vunpack.c.l.b16 %v1511
    %v1564 = vunpack.c.h.b16 %v1511
    %v1565 = vunpack.c.l.b16 %v1512
    %v1566 = vunpack.c.h.b16 %v1512
    %v1567 = vunpack.c.l.b16 %v1513
    %v1568 = vunpack.c.h.b16 %v1513
    %v1569 = vunpack.c.l.b16 %v1514
    %v1570 = vunpack.c.h.b16 %v1514
    %v1571 = vunpack.c.l.b16 %v1515
    %v1572 = vunpack.c.h.b16 %v1515
    %v1573 = vunpack.c.l.b16 %v1516
    %v1574 = vunpack.c.h.b16 %v1516
    %v1575 = vunpack.c.l.b16 %v1517
    %v1576 = vunpack.c.h.b16 %v1517
    %v1577 = vunpack.c.l.b16 %v1518
    %v1578 = vunpack.c.h.b16 %v1518
    %v1579 = vpack.c.b16 %v1549, %v1547
    %v1580 = vpack.c.b16 %v1550, %v1548
    %v1581 = vpack.c.b16 %v1553, %v1551
    %v1582 = vpack.c.b16 %v1554, %v1552
    %v1583 = vpack.c.b16 %v1557, %v1555
    %v1584 = vpack.c.b16 %v1558, %v1556
    %v1585 = vpack.c.b16 %v1561, %v1559
    %v1586 = vpack.c.b16 %v1562, %v1560
    %v1587 = vpack.c.b16 %v1565, %v1563
    %v1588 = vpack.c.b16 %v1566, %v1564
    %v1589 = vpack.c.b16 %v1569, %v1567
    %v1590 = vpack.c.b16 %v1570, %v1568
    %v1591 = vpack.c.b16 %v1573, %v1571
    %v1592 = vpack.c.b16 %v1574, %v1572
    %v1593 = vpack.c.b16 %v1577, %v1575
    %v1594 = vpack.c.b16 %v1578, %v1576
    %1611 = vmatprep.subr.bf16.mxu0 %v1580
    %1612 = vmatpush1.bf16.msra.mxu0 %v1579
    %1613 = vmatprep.subr.bf16.mxu0 %v1582
    %1614 = vmatpush1.bf16.msra.mxu0 %v1581
    %1615 = vmatprep.subr.bf16.mxu0 %v1584
    %1616 = vmatpush1.bf16.msra.mxu0 %v1583
    %1617 = vmatprep.subr.bf16.mxu0 %v1586
    %1618 = vmatpush1.bf16.msra.mxu0 %v1585
    %1619 = vmatprep.subr.bf16.mxu0 %v1588
    %1620 = vmatpush1.bf16.msra.mxu0 %v1587
    %1621 = vmatprep.subr.bf16.mxu0 %v1590
    %1622 = vmatpush1.bf16.msra.mxu0 %v1589
    %1623 = vmatprep.subr.bf16.mxu0 %v1592
    %1624 = vmatpush1.bf16.msra.mxu0 %v1591
    %1625 = vmatprep.subr.bf16.mxu0 %v1594
    %1626 = vmatpush1.bf16.msra.mxu0 %v1593
    %1627 = vmatprep.subr.bf16.mxu0 0
    %1628 = vmatpush1.bf16.msra.mxu0 0
    %1629 = vmatprep.subr.bf16.mxu0 0
    %1630 = vmatpush1.bf16.msra.mxu0 0
    %1631 = vmatprep.subr.bf16.mxu0 0
    %1632 = vmatpush1.bf16.msra.mxu0 0
    %1633 = vmatprep.subr.bf16.mxu0 0
    %1634 = vmatpush1.bf16.msra.mxu0 0
    %1635 = vmatprep.subr.bf16.mxu0 0
    %1636 = vmatpush1.bf16.msra.mxu0 0
    %1637 = vmatprep.subr.bf16.mxu0 0
    %1638 = vmatpush1.bf16.msra.mxu0 0
    %1639 = vmatprep.subr.bf16.mxu0 0
    %1640 = vmatpush1.bf16.msra.mxu0 0
    %1641 = vmatprep.subr.bf16.mxu0 0
    %1642 = vmatpush1.bf16.msra.mxu0 0
    %1643 = vmatprep.mubr.bf16.mxu0 0
    %1644 = vmatmul.mubr.bf16.gmra.mrb[0].mxu0 %v1502
    %v1645 = vpop.f32.mrb[0].mxu0
    %v1646 = vadd.f32 %v1524, %v1645
    %v1647 = vpop.f32.mrb[0].mxu0
    %v1648 = vadd.f32 %v1528, %v1647
    %v1649 = vpop.f32.mrb[0].mxu0
    %v1650 = vpop.f32.mrb[0].mxu0
    %1651 = vdwg.mxu0
    %v1652 = vmul.f32 %v1646, 0.5
    %v1653 = vtanh.pop %v1652
    %v1654 = vmul.f32 %v1653, 0.5
    %v1655 = vadd.f32 %v1654, 0.5
    %v1656 = vtanh.pop %v1648
    %v1657 = vmul.f32 %v1648, 0.5
    %v1658 = vtanh.pop %v1657
    %v1659 = vmul.f32 %v1658, 0.5
    %v1660 = vadd.f32 %v1659, 0.5
    %v1661 = vmul.f32 %v1655, %v1656
    %v1662 = vtanh.pop %v1661
    %1664 = vrot.lane.b32.xlu0 %v1662, 64
    %v1665 = vpop.permute.xlu0 %1664
    %v1667 = vmul.f32 %v1660, %v1665
    %v1668 = vpack.c.bf16 %v1667, %v1667
    %v1669 = vld [vmem:[%s15] sm:$0xf]
    %v1670 = vld [vmem:[%s15 + $0x4] sm:$0xf]
    %v1671 = vld [vmem:[%s15 + $0x8] sm:$0xf]
    %v1672 = vld [vmem:[%s15 + $0xc] sm:$0xf]
    %v1673 = vld [vmem:[%s15 + $0x10] sm:$0xf]
    %v1674 = vld [vmem:[%s15 + $0x14] sm:$0xf]
    %v1675 = vld [vmem:[%s15 + $0x18] sm:$0xf]
    %v1676 = vld [vmem:[%s15 + $0x1c] sm:$0xf]
    %v1677 = vld [vmem:[%s16] sm:$0x1]
    %v1679 = vlaneseq
    %v1680 = vshrl.u32 %v1679, 7
    %v1681 = vsub.s32 0, %v1680
    %v1682 = vrot.slane %v1677, %v1681
    %1685 = vrot.lane.b32.xlu0 %v1668, 64
    %v1686 = vpop.permute.xlu0 %1685
    %v1695 = vunpack.c.l.b16 %v1669
    %v1696 = vunpack.c.l.b16 %v1670
    %v1697 = vunpack.c.l.b16 %v1671
    %v1698 = vunpack.c.l.b16 %v1672
    %v1699 = vunpack.c.l.b16 %v1673
    %v1700 = vunpack.c.l.b16 %v1674
    %v1701 = vunpack.c.l.b16 %v1675
    %v1702 = vunpack.c.l.b16 %v1676
    %v1703 = vpack.c.b16 %v1696, %v1695
    %v1704 = vpack.c.b16 %v1698, %v1697
    %v1705 = vpack.c.b16 %v1700, %v1699
    %v1706 = vpack.c.b16 %v1702, %v1701
    %v1712 = vsel %vm657, %v1686, 0
    %1714 = vmatprep.subr.bf16.mxu0 0
    %1715 = vmatpush1.bf16.msra.mxu0 %v1703
    %1716 = vmatprep.subr.bf16.mxu0 0
    %1717 = vmatpush1.bf16.msra.mxu0 %v1704
    %1718 = vmatprep.subr.bf16.mxu0 0
    %1719 = vmatpush1.bf16.msra.mxu0 %v1705
    %1720 = vmatprep.subr.bf16.mxu0 0
    %1721 = vmatpush1.bf16.msra.mxu0 %v1706
    %1722 = vmatprep.subr.bf16.mxu0 0
    %1723 = vmatpush1.bf16.msra.mxu0 0
    %1724 = vmatprep.subr.bf16.mxu0 0
    %1725 = vmatpush1.bf16.msra.mxu0 0
    %1726 = vmatprep.subr.bf16.mxu0 0
    %1727 = vmatpush1.bf16.msra.mxu0 0
    %1728 = vmatprep.subr.bf16.mxu0 0
    %1729 = vmatpush1.bf16.msra.mxu0 0
    %1730 = vmatprep.subr.bf16.mxu0 0
    %1731 = vmatpush1.bf16.msra.mxu0 0
    %1732 = vmatprep.subr.bf16.mxu0 0
    %1733 = vmatpush1.bf16.msra.mxu0 0
    %1734 = vmatprep.subr.bf16.mxu0 0
    %1735 = vmatpush1.bf16.msra.mxu0 0
    %1736 = vmatprep.subr.bf16.mxu0 0
    %1737 = vmatpush1.bf16.msra.mxu0 0
    %1738 = vmatprep.subr.bf16.mxu0 0
    %1739 = vmatpush1.bf16.msra.mxu0 0
    %1740 = vmatprep.subr.bf16.mxu0 0
    %1741 = vmatpush1.bf16.msra.mxu0 0
    %1742 = vmatprep.subr.bf16.mxu0 0
    %1743 = vmatpush1.bf16.msra.mxu0 0
    %1744 = vmatprep.subr.bf16.mxu0 0
    %1745 = vmatpush1.bf16.msra.mxu0 0
    %1746 = vmatprep.mubr.bf16.mxu0 0
    %1747 = vmatmul.mubr.bf16.gmra.mrb[0].mxu0 %v1712
    %v1748 = vpop.f32.mrb[0].mxu0
    %v1749 = vadd.f32 %v1682, %v1748
    %v1750 = vpop.f32.mrb[0].mxu0
    %v1751 = vpop.f32.mrb[0].mxu0
    %v1752 = vpop.f32.mrb[0].mxu0
    %1753 = vdwg.mxu0
    %vm1754 = vcmask 60416
    %1755 = vst.msk [vmem:[#allocation2] sm:$0xf] %vm1754, %v1749
    // Predicated region
    $region70: #{a_call__.1} parent=1 // pred_check
      _
    $region71: #{a_call__.1} parent=1 // pred_check_branch
      %1757 = sbr.rel (0) target = $region73
    $region72: #{a_call__.1} parent=1 // pred_region
      %s1759 = ssub.s32 64, 64
      %1760 = vsyncadd [#allocation3], %s1759
      %s1762 = sshll.u32 [#allocation2], 4
      %s1763 = int_to_ptr.vmem [resolvable:$true] %s1762
      %1765 = dma.vmem_to_hbm [thread:$0]  %s1763, 64, %s17, [#allocation3]
    $region73: #{a_call__.1} parent=1 // pred_fallthru
      _
    // Predicated region
    $region74: #{a_call__.1} parent=1 // pred_check
      _
    $region75: #{a_call__.1} parent=1 // pred_check_branch
      %1767 = sbr.rel (0) target = $region77
    $region76: #{a_call__.1} parent=1 // pred_region
      %1768 = dma.done [#allocation3], 64
    $region77: #{a_call__.1} parent=1 // pred_fallthru
      _
    %1769 = vsyncpa [#allocation3], 1

</llo_original>
